<compile_context>
chip_gen: v7x
topology: tpu7x:2x2x1
jax: 0.10.0
libtpu: 0.0.40
codegen_flags: <defaults>
</compile_context>

<pallas_src>
import functools

import jax
import jax.numpy as jnp
from jax.experimental import pallas as pl
from jax.experimental.pallas import tpu as pltpu

D_IN = 784
LAYER_DIMS = [(784, 256), (256, 64), (64, 20),    # encoder
              (20, 64), (64, 256), (256, 784)]    # decoder


# ---------------------------------------------------------------------------
# Pallas kernel: fused encoder + decoder MLP on one batch tile
# ---------------------------------------------------------------------------
def ae_kernel(x_ref,
              w1_ref, b1_ref, w2_ref, b2_ref, w3_ref, b3_ref,
              w4_ref, b4_ref, w5_ref, b5_ref, w6_ref, b6_ref,
              o_ref):
    def linear(h, w_ref, b_ref):
        # bf16 x bf16 matmul on the MXU, f32 accumulation, f32 bias add.
        return jnp.dot(h, w_ref[...],
                       preferred_element_type=jnp.float32) + b_ref[...]

    # In-kernel cast of the raw f32 input to bf16 (free on the VPU while the
    # kernel is HBM-bound; avoids a separate XLA cast/pad pass over HBM).
    h = x_ref[...].astype(jnp.bfloat16)                                   # [TB, 784]

    # encoder: 784 -> 256 -> 64 -> 20, ReLU after each
    h = jnp.maximum(linear(h, w1_ref, b1_ref), 0.0).astype(jnp.bfloat16)  # [TB, 256]
    h = jnp.maximum(linear(h, w2_ref, b2_ref), 0.0).astype(jnp.bfloat16)  # [TB, 64]
    h = jnp.maximum(linear(h, w3_ref, b3_ref), 0.0).astype(jnp.bfloat16)  # [TB, 20]

    # decoder: 20 -> 64 -> 256 -> 784, ReLU, ReLU, Sigmoid
    h = jnp.maximum(linear(h, w4_ref, b4_ref), 0.0).astype(jnp.bfloat16)  # [TB, 64]
    h = jnp.maximum(linear(h, w5_ref, b5_ref), 0.0).astype(jnp.bfloat16)  # [TB, 256]
    z = linear(h, w6_ref, b6_ref)                                          # [TB, 784] f32

    # sigmoid(z) = 1 / (1 + exp(-z)); divide goes to the EUP via approx recip.
    sig = pl.reciprocal(1.0 + jnp.exp(-z), approx=True)
    o_ref[...] = sig.astype(o_ref.dtype)


# ---------------------------------------------------------------------------
# Wrapper
# ---------------------------------------------------------------------------
def _round_up(a, m):
    return ((a + m - 1) // m) * m


def _choose_tb(B, tb_req):
    """Pick a batch tile: multiple of 8, no bigger than needed, and split into
    >= 2 grid steps when the batch allows it (two TensorCores on v7x)."""
    tb = max(8, _round_up(min(tb_req, B), 8))
    Bp = _round_up(B, tb)
    if Bp // tb < 2 and B >= 16:
        tb = max(8, _round_up((B + 1) // 2, 8))
        Bp = _round_up(B, tb)
    return tb, Bp


@functools.partial(jax.jit, static_argnames=("tb", "out_dtype"))
def ae_forward(x_nchw, params, *, tb=1024, out_dtype=jnp.bfloat16):
    """x_nchw: [B, 1, 28, 28] -> [B, 1, 28, 28] (bf16 by default)."""
    B = x_nchw.shape[0]
    tb_eff, Bp = _choose_tb(B, tb)

    # Flatten only (reshape is free); keep f32, cast happens inside the kernel.
    x = x_nchw.reshape(B, D_IN).astype(jnp.float32)
    if Bp != B:
        x = jnp.pad(x, ((0, Bp - B), (0, 0)))

    # Prepare params: bf16 weights, f32 biases (no lane padding anywhere).
    flat = []
    for (w, b) in params:
        flat.extend([w.astype(jnp.bfloat16), b.astype(jnp.float32).reshape(1, -1)])

    grid = (Bp // tb_eff,)
    x_spec = pl.BlockSpec((tb_eff, D_IN), lambda i: (i, 0))
    o_spec = pl.BlockSpec((tb_eff, D_IN), lambda i: (i, 0))
    # Weights / biases: full-array blocks, constant index_map -> VMEM-resident
    # across all grid steps (no re-DMA per batch tile).
    param_specs = [pl.BlockSpec(p.shape, lambda i: (0, 0)) for p in flat]

    flops_per_row = 2 * sum(k * n for (k, n) in LAYER_DIMS)
    param_bytes = sum(int(p.size) * p.dtype.itemsize for p in flat)
    cost = pl.CostEstimate(
        flops=Bp * flops_per_row,
        transcendentals=Bp * D_IN,                       # sigmoid exp
        bytes_accessed=Bp * D_IN * 4                     # f32 input read
                       + Bp * D_IN * 2                   # bf16 output write
                       + param_bytes,
    )

    out = pl.pallas_call(
        ae_kernel,
        out_shape=jax.ShapeDtypeStruct((Bp, D_IN), jnp.bfloat16),
        grid=grid,
        in_specs=[x_spec] + param_specs,
        out_specs=o_spec,
        compiler_params=pltpu.CompilerParams(
            dimension_semantics=("parallel",),           # megacore on v7x
            vmem_limit_bytes=48 * 1024 * 1024,           # headroom under v7x 64 MiB
        ),
        cost_estimate=cost,
    )(x, *flat)

    out = out[:B].reshape(B, 1, 28, 28)
    if out_dtype != jnp.bfloat16:
        out = out.astype(out_dtype)
    return out


# ---------------------------------------------------------------------------
# Deterministic parameter init (PyTorch nn.Linear-style uniform bound)
# ---------------------------------------------------------------------------
def init_params(key):
    params = []
    for (fan_in, fan_out) in LAYER_DIMS:
        key, kw, kb = jax.random.split(key, 3)
        bound = 1.0 / (fan_in ** 0.5)
        w = jax.random.uniform(kw, (fan_in, fan_out), jnp.float32,
                               minval=-bound, maxval=bound)
        b = jax.random.uniform(kb, (1, fan_out), jnp.float32,
                               minval=-bound, maxval=bound)
        params.append((w, b))
    return params


# ---------------------------------------------------------------------------
# Pure-JAX reference for correctness sanity check
# ---------------------------------------------------------------------------
def ae_ref(x_nchw, params):
    B = x_nchw.shape[0]
    h = x_nchw.reshape(B, D_IN).astype(jnp.float32)
    acts = [jax.nn.relu] * 5 + [jax.nn.sigmoid]
    for (w, b), act in zip(params, acts):
        h = act(h @ w + b)
    return h.reshape(B, 1, 28, 28)


if __name__ == "__main__":
    key = jax.random.PRNGKey(0)
    key, kx = jax.random.split(key)

    B = 2
    x = jax.random.normal(kx, (B, 1, 28, 28), jnp.float32)   # NCHW, C=1
    params = init_params(key)

    out = jax.block_until_ready(ae_forward(x, params))

    # Reference uses the same bf16-quantized weights/input the kernel sees
    # (kernel additionally rounds intermediate activations and the output to
    # bf16 and uses an approx reciprocal for the sigmoid divide).
    q_params = [(w.astype(jnp.bfloat16).astype(jnp.float32), b)
                for (w, b) in params]
    xq = x.astype(jnp.bfloat16).astype(jnp.float32)
    ref = jax.block_until_ready(ae_ref(xq, q_params))

    assert out.shape == (B, 1, 28, 28)
    assert jnp.allclose(out.astype(jnp.float32), ref, atol=3e-2, rtol=3e-2), \
        "mismatch vs reference"

    print("KERNEL_OK")
</pallas_src>

<mosaic_0001>
module attributes {stable_mosaic.version = 11 : i64} {
  func.func @ae_kernel(%arg0: i32, %arg1: memref<8x784xf32, #tpu.memory_space<vmem>>, %arg2: memref<784x256xbf16, #tpu.memory_space<vmem>>, %arg3: memref<1x256xf32, #tpu.memory_space<vmem>>, %arg4: memref<256x64xbf16, #tpu.memory_space<vmem>>, %arg5: memref<1x64xf32, #tpu.memory_space<vmem>>, %arg6: memref<64x20xbf16, #tpu.memory_space<vmem>>, %arg7: memref<1x20xf32, #tpu.memory_space<vmem>>, %arg8: memref<20x64xbf16, #tpu.memory_space<vmem>>, %arg9: memref<1x64xf32, #tpu.memory_space<vmem>>, %arg10: memref<64x256xbf16, #tpu.memory_space<vmem>>, %arg11: memref<1x256xf32, #tpu.memory_space<vmem>>, %arg12: memref<256x784xbf16, #tpu.memory_space<vmem>>, %arg13: memref<1x784xf32, #tpu.memory_space<vmem>>, %arg14: memref<8x784xbf16, #tpu.memory_space<vmem>>) attributes {dimension_semantics = [#tpu.dimension_semantics<parallel>], iteration_bounds = array<i64: 1>, scalar_prefetch = 0 : i64, scratch_operands = 0 : i64, tpu.core_type = #tpu.core_type<tc>, window_params = [{transform_indices = @transform_0, window_bounds = array<i64: 8, 784>}, {pipeline_mode = #tpu.pipeline_mode<synchronous>, transform_indices = @transform_1, window_bounds = array<i64: 784, 256>}, {pipeline_mode = #tpu.pipeline_mode<synchronous>, transform_indices = @transform_2, window_bounds = array<i64: 1, 256>}, {pipeline_mode = #tpu.pipeline_mode<synchronous>, transform_indices = @transform_3, window_bounds = array<i64: 256, 64>}, {pipeline_mode = #tpu.pipeline_mode<synchronous>, transform_indices = @transform_4, window_bounds = array<i64: 1, 64>}, {pipeline_mode = #tpu.pipeline_mode<synchronous>, transform_indices = @transform_5, window_bounds = array<i64: 64, 20>}, {pipeline_mode = #tpu.pipeline_mode<synchronous>, transform_indices = @transform_6, window_bounds = array<i64: 1, 20>}, {pipeline_mode = #tpu.pipeline_mode<synchronous>, transform_indices = @transform_7, window_bounds = array<i64: 20, 64>}, {pipeline_mode = #tpu.pipeline_mode<synchronous>, transform_indices = @transform_8, window_bounds = array<i64: 1, 64>}, {pipeline_mode = #tpu.pipeline_mode<synchronous>, transform_indices = @transform_9, window_bounds = array<i64: 64, 256>}, {pipeline_mode = #tpu.pipeline_mode<synchronous>, transform_indices = @transform_10, window_bounds = array<i64: 1, 256>}, {pipeline_mode = #tpu.pipeline_mode<synchronous>, transform_indices = @transform_11, window_bounds = array<i64: 256, 784>}, {pipeline_mode = #tpu.pipeline_mode<synchronous>, transform_indices = @transform_12, window_bounds = array<i64: 1, 784>}, {transform_indices = @transform_13, window_bounds = array<i64: 8, 784>}]} {
    %c0 = arith.constant 0 : index
    %c0_0 = arith.constant 0 : index
    %0 = vector.load %arg1[%c0, %c0_0] : memref<8x784xf32, #tpu.memory_space<vmem>>, vector<8x784xf32>
    %1 = arith.truncf %0 : vector<8x784xf32> to vector<8x784xbf16>
    %c0_1 = arith.constant 0 : index
    %c0_2 = arith.constant 0 : index
    %2 = vector.load %arg2[%c0_1, %c0_2] : memref<784x256xbf16, #tpu.memory_space<vmem>>, vector<784x256xbf16>
    %cst = arith.constant dense<0.000000e+00> : vector<8x256xf32>
    %3 = tpu.matmul %1, %2, %cst {dimension_numbers = #tpu.dot_dimension_numbers<[1], [0], [0], [1], [0, 0, 1, 1], [], []>} : vector<8x784xbf16>, vector<784x256xbf16>, vector<8x256xf32> -> vector<8x256xf32>
    %c0_3 = arith.constant 0 : index
    %c0_4 = arith.constant 0 : index
    %4 = vector.load %arg3[%c0_3, %c0_4] : memref<1x256xf32, #tpu.memory_space<vmem>>, vector<1x256xf32>
    %5 = vector.broadcast %4 : vector<1x256xf32> to vector<8x256xf32>
    %6 = arith.addf %3, %5 : vector<8x256xf32>
    %cst_5 = arith.constant 0.000000e+00 : f32
    %7 = vector.broadcast %cst_5 : f32 to vector<8x256xf32>
    %8 = arith.maximumf %6, %7 : vector<8x256xf32>
    %9 = arith.truncf %8 : vector<8x256xf32> to vector<8x256xbf16>
    %c0_6 = arith.constant 0 : index
    %c0_7 = arith.constant 0 : index
    %10 = vector.load %arg4[%c0_6, %c0_7] : memref<256x64xbf16, #tpu.memory_space<vmem>>, vector<256x64xbf16>
    %cst_8 = arith.constant dense<0.000000e+00> : vector<8x64xf32>
    %11 = tpu.matmul %9, %10, %cst_8 {dimension_numbers = #tpu.dot_dimension_numbers<[1], [0], [0], [1], [0, 0, 1, 1], [], []>} : vector<8x256xbf16>, vector<256x64xbf16>, vector<8x64xf32> -> vector<8x64xf32>
    %c0_9 = arith.constant 0 : index
    %c0_10 = arith.constant 0 : index
    %12 = vector.load %arg5[%c0_9, %c0_10] : memref<1x64xf32, #tpu.memory_space<vmem>>, vector<1x64xf32>
    %13 = vector.broadcast %12 : vector<1x64xf32> to vector<8x64xf32>
    %14 = arith.addf %11, %13 : vector<8x64xf32>
    %cst_11 = arith.constant 0.000000e+00 : f32
    %15 = vector.broadcast %cst_11 : f32 to vector<8x64xf32>
    %16 = arith.maximumf %14, %15 : vector<8x64xf32>
    %17 = arith.truncf %16 : vector<8x64xf32> to vector<8x64xbf16>
    %c0_12 = arith.constant 0 : index
    %c0_13 = arith.constant 0 : index
    %18 = vector.load %arg6[%c0_12, %c0_13] : memref<64x20xbf16, #tpu.memory_space<vmem>>, vector<64x20xbf16>
    %cst_14 = arith.constant dense<0.000000e+00> : vector<8x20xf32>
    %19 = tpu.matmul %17, %18, %cst_14 {dimension_numbers = #tpu.dot_dimension_numbers<[1], [0], [0], [1], [0, 0, 1, 1], [], []>} : vector<8x64xbf16>, vector<64x20xbf16>, vector<8x20xf32> -> vector<8x20xf32>
    %c0_15 = arith.constant 0 : index
    %c0_16 = arith.constant 0 : index
    %20 = vector.load %arg7[%c0_15, %c0_16] : memref<1x20xf32, #tpu.memory_space<vmem>>, vector<1x20xf32>
    %21 = vector.broadcast %20 : vector<1x20xf32> to vector<8x20xf32>
    %22 = arith.addf %19, %21 : vector<8x20xf32>
    %cst_17 = arith.constant 0.000000e+00 : f32
    %23 = vector.broadcast %cst_17 : f32 to vector<8x20xf32>
    %24 = arith.maximumf %22, %23 : vector<8x20xf32>
    %25 = arith.truncf %24 : vector<8x20xf32> to vector<8x20xbf16>
    %c0_18 = arith.constant 0 : index
    %c0_19 = arith.constant 0 : index
    %26 = vector.load %arg8[%c0_18, %c0_19] : memref<20x64xbf16, #tpu.memory_space<vmem>>, vector<20x64xbf16>
    %cst_20 = arith.constant dense<0.000000e+00> : vector<8x64xf32>
    %27 = tpu.matmul %25, %26, %cst_20 {dimension_numbers = #tpu.dot_dimension_numbers<[1], [0], [0], [1], [0, 0, 1, 1], [], []>} : vector<8x20xbf16>, vector<20x64xbf16>, vector<8x64xf32> -> vector<8x64xf32>
    %c0_21 = arith.constant 0 : index
    %c0_22 = arith.constant 0 : index
    %28 = vector.load %arg9[%c0_21, %c0_22] : memref<1x64xf32, #tpu.memory_space<vmem>>, vector<1x64xf32>
    %29 = vector.broadcast %28 : vector<1x64xf32> to vector<8x64xf32>
    %30 = arith.addf %27, %29 : vector<8x64xf32>
    %cst_23 = arith.constant 0.000000e+00 : f32
    %31 = vector.broadcast %cst_23 : f32 to vector<8x64xf32>
    %32 = arith.maximumf %30, %31 : vector<8x64xf32>
    %33 = arith.truncf %32 : vector<8x64xf32> to vector<8x64xbf16>
    %c0_24 = arith.constant 0 : index
    %c0_25 = arith.constant 0 : index
    %34 = vector.load %arg10[%c0_24, %c0_25] : memref<64x256xbf16, #tpu.memory_space<vmem>>, vector<64x256xbf16>
    %cst_26 = arith.constant dense<0.000000e+00> : vector<8x256xf32>
    %35 = tpu.matmul %33, %34, %cst_26 {dimension_numbers = #tpu.dot_dimension_numbers<[1], [0], [0], [1], [0, 0, 1, 1], [], []>} : vector<8x64xbf16>, vector<64x256xbf16>, vector<8x256xf32> -> vector<8x256xf32>
    %c0_27 = arith.constant 0 : index
    %c0_28 = arith.constant 0 : index
    %36 = vector.load %arg11[%c0_27, %c0_28] : memref<1x256xf32, #tpu.memory_space<vmem>>, vector<1x256xf32>
    %37 = vector.broadcast %36 : vector<1x256xf32> to vector<8x256xf32>
    %38 = arith.addf %35, %37 : vector<8x256xf32>
    %cst_29 = arith.constant 0.000000e+00 : f32
    %39 = vector.broadcast %cst_29 : f32 to vector<8x256xf32>
    %40 = arith.maximumf %38, %39 : vector<8x256xf32>
    %41 = arith.truncf %40 : vector<8x256xf32> to vector<8x256xbf16>
    %c0_30 = arith.constant 0 : index
    %c0_31 = arith.constant 0 : index
    %42 = vector.load %arg12[%c0_30, %c0_31] : memref<256x784xbf16, #tpu.memory_space<vmem>>, vector<256x784xbf16>
    %cst_32 = arith.constant dense<0.000000e+00> : vector<8x784xf32>
    %43 = tpu.matmul %41, %42, %cst_32 {dimension_numbers = #tpu.dot_dimension_numbers<[1], [0], [0], [1], [0, 0, 1, 1], [], []>} : vector<8x256xbf16>, vector<256x784xbf16>, vector<8x784xf32> -> vector<8x784xf32>
    %c0_33 = arith.constant 0 : index
    %c0_34 = arith.constant 0 : index
    %44 = vector.load %arg13[%c0_33, %c0_34] : memref<1x784xf32, #tpu.memory_space<vmem>>, vector<1x784xf32>
    %45 = vector.broadcast %44 : vector<1x784xf32> to vector<8x784xf32>
    %46 = arith.addf %43, %45 : vector<8x784xf32>
    %cst_35 = arith.constant 0.000000e+00 : f32
    %47 = vector.broadcast %cst_35 : f32 to vector<8x784xf32>
    %48 = arith.subf %47, %46 : vector<8x784xf32>
    %49 = math.exp %48 : vector<8x784xf32>
    %cst_36 = arith.constant 1.000000e+00 : f32
    %50 = vector.broadcast %cst_36 : f32 to vector<8x784xf32>
    %51 = arith.addf %50, %49 : vector<8x784xf32>
    %52 = tpu.reciprocal %51 {approx = true} : vector<8x784xf32> -> vector<8x784xf32>
    %53 = arith.truncf %52 : vector<8x784xf32> to vector<8x784xbf16>
    %c0_37 = arith.constant 0 : index
    %c0_38 = arith.constant 0 : index
    %54 = vector.load %arg14[%c0_37, %c0_38] : memref<8x784xbf16, #tpu.memory_space<vmem>>, vector<8x784xbf16>
    tpu.vector_store %arg14[%c0_37, %c0_38], %53 {strides = array<i32>} : memref<8x784xbf16, #tpu.memory_space<vmem>>, vector<8x784xbf16>,
    return
  }
  func.func @transform_0(%arg0: i32) -> (i32, i32) {
    %c0_i32 = arith.constant 0 : i32
    %c0_i32_0 = arith.constant 0 : i32
    return %arg0, %c0_i32 : i32, i32
  }
  func.func @transform_1(%arg0: i32) -> (i32, i32) {
    %c0_i32 = arith.constant 0 : i32
    %c0_i32_0 = arith.constant 0 : i32
    %c0_i32_1 = arith.constant 0 : i32
    return %c0_i32, %c0_i32_0 : i32, i32
  }
  func.func @transform_2(%arg0: i32) -> (i32, i32) {
    %c0_i32 = arith.constant 0 : i32
    %c0_i32_0 = arith.constant 0 : i32
    %c0_i32_1 = arith.constant 0 : i32
    return %c0_i32, %c0_i32_0 : i32, i32
  }
  func.func @transform_3(%arg0: i32) -> (i32, i32) {
    %c0_i32 = arith.constant 0 : i32
    %c0_i32_0 = arith.constant 0 : i32
    %c0_i32_1 = arith.constant 0 : i32
    return %c0_i32, %c0_i32_0 : i32, i32
  }
  func.func @transform_4(%arg0: i32) -> (i32, i32) {
    %c0_i32 = arith.constant 0 : i32
    %c0_i32_0 = arith.constant 0 : i32
    %c0_i32_1 = arith.constant 0 : i32
    return %c0_i32, %c0_i32_0 : i32, i32
  }
  func.func @transform_5(%arg0: i32) -> (i32, i32) {
    %c0_i32 = arith.constant 0 : i32
    %c0_i32_0 = arith.constant 0 : i32
    %c0_i32_1 = arith.constant 0 : i32
    return %c0_i32, %c0_i32_0 : i32, i32
  }
  func.func @transform_6(%arg0: i32) -> (i32, i32) {
    %c0_i32 = arith.constant 0 : i32
    %c0_i32_0 = arith.constant 0 : i32
    %c0_i32_1 = arith.constant 0 : i32
    return %c0_i32, %c0_i32_0 : i32, i32
  }
  func.func @transform_7(%arg0: i32) -> (i32, i32) {
    %c0_i32 = arith.constant 0 : i32
    %c0_i32_0 = arith.constant 0 : i32
    %c0_i32_1 = arith.constant 0 : i32
    return %c0_i32, %c0_i32_0 : i32, i32
  }
  func.func @transform_8(%arg0: i32) -> (i32, i32) {
    %c0_i32 = arith.constant 0 : i32
    %c0_i32_0 = arith.constant 0 : i32
    %c0_i32_1 = arith.constant 0 : i32
    return %c0_i32, %c0_i32_0 : i32, i32
  }
  func.func @transform_9(%arg0: i32) -> (i32, i32) {
    %c0_i32 = arith.constant 0 : i32
    %c0_i32_0 = arith.constant 0 : i32
    %c0_i32_1 = arith.constant 0 : i32
    return %c0_i32, %c0_i32_0 : i32, i32
  }
  func.func @transform_10(%arg0: i32) -> (i32, i32) {
    %c0_i32 = arith.constant 0 : i32
    %c0_i32_0 = arith.constant 0 : i32
    %c0_i32_1 = arith.constant 0 : i32
    return %c0_i32, %c0_i32_0 : i32, i32
  }
  func.func @transform_11(%arg0: i32) -> (i32, i32) {
    %c0_i32 = arith.constant 0 : i32
    %c0_i32_0 = arith.constant 0 : i32
    %c0_i32_1 = arith.constant 0 : i32
    return %c0_i32, %c0_i32_0 : i32, i32
  }
  func.func @transform_12(%arg0: i32) -> (i32, i32) {
    %c0_i32 = arith.constant 0 : i32
    %c0_i32_0 = arith.constant 0 : i32
    %c0_i32_1 = arith.constant 0 : i32
    return %c0_i32, %c0_i32_0 : i32, i32
  }
  func.func @transform_13(%arg0: i32) -> (i32, i32) {
    %c0_i32 = arith.constant 0 : i32
    %c0_i32_0 = arith.constant 0 : i32
    return %arg0, %c0_i32 : i32, i32
  }
}

</mosaic_0001>

<llo_original>
// kernel: ae_forward.1
$region0: #{ae_forward.1}
  #allocation0 [shape = 'u32[]', space=smem, size = 0x4, offset = 0x4, fixed_abs, tag = 'smem constant byte address 0x4 - core index']
  #allocation1 [shape = 'u32[144,128]{1,0:T(1,128)}', space=vmem, size = 0x12000, scoped, tag = 'internal scratch']
  %s0 = inlined_call_operand.vmem [shape: f32[8,784], index: 0, kind: input, shape index: {}]
  %s1 = inlined_call_operand.vmem [shape: bf16[784,256], index: 1, kind: input, shape index: {}]
  %s2 = inlined_call_operand.vmem [shape: f32[1,256], index: 2, kind: input, shape index: {}]
  %s3 = inlined_call_operand.vmem [shape: bf16[256,64], index: 3, kind: input, shape index: {}]
  %s4 = inlined_call_operand.vmem [shape: f32[1,64], index: 4, kind: input, shape index: {}]
  %s5 = inlined_call_operand.vmem [shape: bf16[64,20], index: 5, kind: input, shape index: {}]
  %s6 = inlined_call_operand.vmem [shape: f32[1,20], index: 6, kind: input, shape index: {}]
  %s7 = inlined_call_operand.vmem [shape: bf16[20,64], index: 7, kind: input, shape index: {}]
  %s8 = inlined_call_operand.vmem [shape: f32[1,64], index: 8, kind: input, shape index: {}]
  %s9 = inlined_call_operand.vmem [shape: bf16[64,256], index: 9, kind: input, shape index: {}]
  %s10 = inlined_call_operand.vmem [shape: f32[1,256], index: 10, kind: input, shape index: {}]
  %s11 = inlined_call_operand.vmem [shape: bf16[256,784], index: 11, kind: input, shape index: {}]
  %s12 = inlined_call_operand.vmem [shape: f32[1,784], index: 12, kind: input, shape index: {}]
  %s13 = inlined_call_operand.vmem [shape: bf16[8,784], index: 13, kind: output, shape index: {}]
  %s14 = sld [smem:[#allocation0]]
  $region62: #{ae_forward.1} parent=0
    _
  %s16 = ssub.s32 1, %s14
  %s17 = scalar_select 0, %s16, %s14
  // Predicated region
  $region2: #{ae_forward.1} parent=0 // pred_check
    _
  $region3: #{ae_forward.1} parent=0 // pred_check_branch
    %19 = sbr.rel (0) target = $region5
  $region4: #{ae_forward.1} parent=0 // pred_region
    _
  $region5: #{ae_forward.1} parent=0 // pred_fallthru
    _
  // Predicated region
  $region6: #{ae_forward.1} parent=0 // pred_check
    _
  $region7: #{ae_forward.1} parent=0 // pred_check_branch
    %21 = sbr.rel (0) target = $region9
  $region8: #{ae_forward.1} parent=0 // pred_region
    _
  $region9: #{ae_forward.1} parent=0 // pred_fallthru
    _
  // Predicated region
  $region10: #{ae_forward.1} parent=0 // pred_check
    _
  $region11: #{ae_forward.1} parent=0 // pred_check_branch
    %23 = sbr.rel (0) target = $region13
  $region12: #{ae_forward.1} parent=0 // pred_region
    _
  $region13: #{ae_forward.1} parent=0 // pred_fallthru
    _
  // Predicated region
  $region14: #{ae_forward.1} parent=0 // pred_check
    _
  $region15: #{ae_forward.1} parent=0 // pred_check_branch
    %25 = sbr.rel (0) target = $region17
  $region16: #{ae_forward.1} parent=0 // pred_region
    _
  $region17: #{ae_forward.1} parent=0 // pred_fallthru
    _
  // Predicated region
  $region18: #{ae_forward.1} parent=0 // pred_check
    _
  $region19: #{ae_forward.1} parent=0 // pred_check_branch
    %27 = sbr.rel (0) target = $region21
  $region20: #{ae_forward.1} parent=0 // pred_region
    _
  $region21: #{ae_forward.1} parent=0 // pred_fallthru
    _
  // Predicated region
  $region22: #{ae_forward.1} parent=0 // pred_check
    _
  $region23: #{ae_forward.1} parent=0 // pred_check_branch
    %29 = sbr.rel (0) target = $region25
  $region24: #{ae_forward.1} parent=0 // pred_region
    _
  $region25: #{ae_forward.1} parent=0 // pred_fallthru
    _
  // Predicated region
  $region26: #{ae_forward.1} parent=0 // pred_check
    _
  $region27: #{ae_forward.1} parent=0 // pred_check_branch
    %31 = sbr.rel (0) target = $region29
  $region28: #{ae_forward.1} parent=0 // pred_region
    _
  $region29: #{ae_forward.1} parent=0 // pred_fallthru
    _
  // Predicated region
  $region30: #{ae_forward.1} parent=0 // pred_check
    _
  $region31: #{ae_forward.1} parent=0 // pred_check_branch
    %33 = sbr.rel (0) target = $region33
  $region32: #{ae_forward.1} parent=0 // pred_region
    _
  $region33: #{ae_forward.1} parent=0 // pred_fallthru
    _
  // Predicated region
  $region34: #{ae_forward.1} parent=0 // pred_check
    _
  $region35: #{ae_forward.1} parent=0 // pred_check_branch
    %35 = sbr.rel (0) target = $region37
  $region36: #{ae_forward.1} parent=0 // pred_region
    _
  $region37: #{ae_forward.1} parent=0 // pred_fallthru
    _
  // Predicated region
  $region38: #{ae_forward.1} parent=0 // pred_check
    _
  $region39: #{ae_forward.1} parent=0 // pred_check_branch
    %37 = sbr.rel (0) target = $region41
  $region40: #{ae_forward.1} parent=0 // pred_region
    _
  $region41: #{ae_forward.1} parent=0 // pred_fallthru
    _
  // Predicated region
  $region42: #{ae_forward.1} parent=0 // pred_check
    _
  $region43: #{ae_forward.1} parent=0 // pred_check_branch
    %39 = sbr.rel (0) target = $region45
  $region44: #{ae_forward.1} parent=0 // pred_region
    _
  $region45: #{ae_forward.1} parent=0 // pred_fallthru
    _
  // Predicated region
  $region46: #{ae_forward.1} parent=0 // pred_check
    _
  $region47: #{ae_forward.1} parent=0 // pred_check_branch
    %41 = sbr.rel (0) target = $region49
  $region48: #{ae_forward.1} parent=0 // pred_region
    _
  $region49: #{ae_forward.1} parent=0 // pred_fallthru
    _
  // Predicated region
  $region50: #{ae_forward.1} parent=0 // pred_check
    _
  $region51: #{ae_forward.1} parent=0 // pred_check_branch
    %43 = sbr.rel (0) target = $region53
  $region52: #{ae_forward.1} parent=0 // pred_region
    _
  $region53: #{ae_forward.1} parent=0 // pred_fallthru
    _
  %v45 = vld [vmem:[%s0] sm:$0xff]
  %v46 = vld [vmem:[%s0 + $0x8] sm:$0xff]
  %v47 = vld [vmem:[%s0 + $0x10] sm:$0xff]
  %v48 = vld [vmem:[%s0 + $0x18] sm:$0xff]
  %v49 = vld [vmem:[%s0 + $0x20] sm:$0xff]
  %v50 = vld [vmem:[%s0 + $0x28] sm:$0xff]
  %v51 = vld [vmem:[%s0 + $0x30] sm:$0xff]
  %v52 = vpack.c.bf16 %v45, %v45
  %v53 = vpack.c.bf16 %v46, %v46
  %v54 = vpack.c.bf16 %v47, %v47
  %v55 = vpack.c.bf16 %v48, %v48
  %v56 = vpack.c.bf16 %v49, %v49
  %v57 = vpack.c.bf16 %v50, %v50
  %v58 = vpack.c.bf16 %v51, %v51
  %v59 = vld [vmem:[%s1] sm:$0xff]
  %v60 = vld [vmem:[%s1 + $0x8] sm:$0xff]
  %v61 = vld [vmem:[%s1 + $0x10] sm:$0xff]
  %v62 = vld [vmem:[%s1 + $0x18] sm:$0xff]
  %v63 = vld [vmem:[%s1 + $0x20] sm:$0xff]
  %v64 = vld [vmem:[%s1 + $0x28] sm:$0xff]
  %v65 = vld [vmem:[%s1 + $0x30] sm:$0xff]
  %v66 = vld [vmem:[%s1 + $0x38] sm:$0xff]
  %v67 = vld [vmem:[%s1 + $0x40] sm:$0xff]
  %v68 = vld [vmem:[%s1 + $0x48] sm:$0xff]
  %v69 = vld [vmem:[%s1 + $0x50] sm:$0xff]
  %v70 = vld [vmem:[%s1 + $0x58] sm:$0xff]
  %v71 = vld [vmem:[%s1 + $0x60] sm:$0xff]
  %v72 = vld [vmem:[%s1 + $0x68] sm:$0xff]
  %v73 = vld [vmem:[%s1 + $0x70] sm:$0xff]
  %v74 = vld [vmem:[%s1 + $0x78] sm:$0xff]
  %v75 = vld [vmem:[%s1 + $0x80] sm:$0xff]
  %v76 = vld [vmem:[%s1 + $0x88] sm:$0xff]
  %v77 = vld [vmem:[%s1 + $0x90] sm:$0xff]
  %v78 = vld [vmem:[%s1 + $0x98] sm:$0xff]
  %v79 = vld [vmem:[%s1 + $0xa0] sm:$0xff]
  %v80 = vld [vmem:[%s1 + $0xa8] sm:$0xff]
  %v81 = vld [vmem:[%s1 + $0xb0] sm:$0xff]
  %v82 = vld [vmem:[%s1 + $0xb8] sm:$0xff]
  %v83 = vld [vmem:[%s1 + $0xc0] sm:$0xff]
  %v84 = vld [vmem:[%s1 + $0xc8] sm:$0xff]
  %v85 = vld [vmem:[%s1 + $0xd0] sm:$0xff]
  %v86 = vld [vmem:[%s1 + $0xd8] sm:$0xff]
  %v87 = vld [vmem:[%s1 + $0xe0] sm:$0xff]
  %v88 = vld [vmem:[%s1 + $0xe8] sm:$0xff]
  %v89 = vld [vmem:[%s1 + $0xf0] sm:$0xff]
  %v90 = vld [vmem:[%s1 + $0xf8] sm:$0xff]
  %v91 = vld [vmem:[%s1 + $0x100] sm:$0xff]
  %v92 = vld [vmem:[%s1 + $0x108] sm:$0xff]
  %v93 = vld [vmem:[%s1 + $0x110] sm:$0xff]
  %v94 = vld [vmem:[%s1 + $0x118] sm:$0xff]
  %v95 = vld [vmem:[%s1 + $0x120] sm:$0xff]
  %v96 = vld [vmem:[%s1 + $0x128] sm:$0xff]
  %v97 = vld [vmem:[%s1 + $0x130] sm:$0xff]
  %v98 = vld [vmem:[%s1 + $0x138] sm:$0xff]
  %v99 = vld [vmem:[%s1 + $0x140] sm:$0xff]
  %v100 = vld [vmem:[%s1 + $0x148] sm:$0xff]
  %v101 = vld [vmem:[%s1 + $0x150] sm:$0xff]
  %v102 = vld [vmem:[%s1 + $0x158] sm:$0xff]
  %v103 = vld [vmem:[%s1 + $0x160] sm:$0xff]
  %v104 = vld [vmem:[%s1 + $0x168] sm:$0xff]
  %v105 = vld [vmem:[%s1 + $0x170] sm:$0xff]
  %v106 = vld [vmem:[%s1 + $0x178] sm:$0xff]
  %v107 = vld [vmem:[%s1 + $0x180] sm:$0xff]
  %v108 = vld [vmem:[%s1 + $0x188] sm:$0xff]
  %v109 = vld [vmem:[%s1 + $0x190] sm:$0xff]
  %v110 = vld [vmem:[%s1 + $0x198] sm:$0xff]
  %v111 = vld [vmem:[%s1 + $0x1a0] sm:$0xff]
  %v112 = vld [vmem:[%s1 + $0x1a8] sm:$0xff]
  %v113 = vld [vmem:[%s1 + $0x1b0] sm:$0xff]
  %v114 = vld [vmem:[%s1 + $0x1b8] sm:$0xff]
  %v115 = vld [vmem:[%s1 + $0x1c0] sm:$0xff]
  %v116 = vld [vmem:[%s1 + $0x1c8] sm:$0xff]
  %v117 = vld [vmem:[%s1 + $0x1d0] sm:$0xff]
  %v118 = vld [vmem:[%s1 + $0x1d8] sm:$0xff]
  %v119 = vld [vmem:[%s1 + $0x1e0] sm:$0xff]
  %v120 = vld [vmem:[%s1 + $0x1e8] sm:$0xff]
  %v121 = vld [vmem:[%s1 + $0x1f0] sm:$0xff]
  %v122 = vld [vmem:[%s1 + $0x1f8] sm:$0xff]
  %v123 = vld [vmem:[%s1 + $0x200] sm:$0xff]
  %v124 = vld [vmem:[%s1 + $0x208] sm:$0xff]
  %v125 = vld [vmem:[%s1 + $0x210] sm:$0xff]
  %v126 = vld [vmem:[%s1 + $0x218] sm:$0xff]
  %v127 = vld [vmem:[%s1 + $0x220] sm:$0xff]
  %v128 = vld [vmem:[%s1 + $0x228] sm:$0xff]
  %v129 = vld [vmem:[%s1 + $0x230] sm:$0xff]
  %v130 = vld [vmem:[%s1 + $0x238] sm:$0xff]
  %v131 = vld [vmem:[%s1 + $0x240] sm:$0xff]
  %v132 = vld [vmem:[%s1 + $0x248] sm:$0xff]
  %v133 = vld [vmem:[%s1 + $0x250] sm:$0xff]
  %v134 = vld [vmem:[%s1 + $0x258] sm:$0xff]
  %v135 = vld [vmem:[%s1 + $0x260] sm:$0xff]
  %v136 = vld [vmem:[%s1 + $0x268] sm:$0xff]
  %v137 = vld [vmem:[%s1 + $0x270] sm:$0xff]
  %v138 = vld [vmem:[%s1 + $0x278] sm:$0xff]
  %v139 = vld [vmem:[%s1 + $0x280] sm:$0xff]
  %v140 = vld [vmem:[%s1 + $0x288] sm:$0xff]
  %v141 = vld [vmem:[%s1 + $0x290] sm:$0xff]
  %v142 = vld [vmem:[%s1 + $0x298] sm:$0xff]
  %v143 = vld [vmem:[%s1 + $0x2a0] sm:$0xff]
  %v144 = vld [vmem:[%s1 + $0x2a8] sm:$0xff]
  %v145 = vld [vmem:[%s1 + $0x2b0] sm:$0xff]
  %v146 = vld [vmem:[%s1 + $0x2b8] sm:$0xff]
  %v147 = vld [vmem:[%s1 + $0x2c0] sm:$0xff]
  %v148 = vld [vmem:[%s1 + $0x2c8] sm:$0xff]
  %v149 = vld [vmem:[%s1 + $0x2d0] sm:$0xff]
  %v150 = vld [vmem:[%s1 + $0x2d8] sm:$0xff]
  %v151 = vld [vmem:[%s1 + $0x2e0] sm:$0xff]
  %v152 = vld [vmem:[%s1 + $0x2e8] sm:$0xff]
  %v153 = vld [vmem:[%s1 + $0x2f0] sm:$0xff]
  %v154 = vld [vmem:[%s1 + $0x2f8] sm:$0xff]
  %v155 = vld [vmem:[%s1 + $0x300] sm:$0xff]
  %v156 = vld [vmem:[%s1 + $0x308] sm:$0xff]
  %v157 = vld [vmem:[%s2] sm:$0x3]
  %v159 = vlaneseq
  %v160 = vshrl.u32 %v159, 7
  %v161 = vsub.s32 0, %v160
  %v162 = vrot.slane %v157, %v161
  %v163 = vlaneseq
  %v164 = vshrl.u32 %v163, 7
  %v165 = vsub.s32 1, %v164
  %v166 = vrot.slane %v157, %v165
  %v267 = vunpack.c.l.b16 %v59
  %v268 = vunpack.c.h.b16 %v59
  %v269 = vunpack.c.l.b16 %v60
  %v270 = vunpack.c.h.b16 %v60
  %v271 = vunpack.c.l.b16 %v61
  %v272 = vunpack.c.h.b16 %v61
  %v273 = vunpack.c.l.b16 %v62
  %v274 = vunpack.c.h.b16 %v62
  %v275 = vunpack.c.l.b16 %v63
  %v276 = vunpack.c.h.b16 %v63
  %v277 = vunpack.c.l.b16 %v64
  %v278 = vunpack.c.h.b16 %v64
  %v279 = vunpack.c.l.b16 %v65
  %v280 = vunpack.c.h.b16 %v65
  %v281 = vunpack.c.l.b16 %v66
  %v282 = vunpack.c.h.b16 %v66
  %v283 = vunpack.c.l.b16 %v67
  %v284 = vunpack.c.h.b16 %v67
  %v285 = vunpack.c.l.b16 %v68
  %v286 = vunpack.c.h.b16 %v68
  %v287 = vunpack.c.l.b16 %v69
  %v288 = vunpack.c.h.b16 %v69
  %v289 = vunpack.c.l.b16 %v70
  %v290 = vunpack.c.h.b16 %v70
  %v291 = vunpack.c.l.b16 %v71
  %v292 = vunpack.c.h.b16 %v71
  %v293 = vunpack.c.l.b16 %v72
  %v294 = vunpack.c.h.b16 %v72
  %v295 = vunpack.c.l.b16 %v73
  %v296 = vunpack.c.h.b16 %v73
  %v297 = vunpack.c.l.b16 %v74
  %v298 = vunpack.c.h.b16 %v74
  %v299 = vunpack.c.l.b16 %v75
  %v300 = vunpack.c.h.b16 %v75
  %v301 = vunpack.c.l.b16 %v76
  %v302 = vunpack.c.h.b16 %v76
  %v303 = vunpack.c.l.b16 %v77
  %v304 = vunpack.c.h.b16 %v77
  %v305 = vunpack.c.l.b16 %v78
  %v306 = vunpack.c.h.b16 %v78
  %v307 = vunpack.c.l.b16 %v79
  %v308 = vunpack.c.h.b16 %v79
  %v309 = vunpack.c.l.b16 %v80
  %v310 = vunpack.c.h.b16 %v80
  %v311 = vunpack.c.l.b16 %v81
  %v312 = vunpack.c.h.b16 %v81
  %v313 = vunpack.c.l.b16 %v82
  %v314 = vunpack.c.h.b16 %v82
  %v315 = vunpack.c.l.b16 %v83
  %v316 = vunpack.c.h.b16 %v83
  %v317 = vunpack.c.l.b16 %v84
  %v318 = vunpack.c.h.b16 %v84
  %v319 = vunpack.c.l.b16 %v85
  %v320 = vunpack.c.h.b16 %v85
  %v321 = vunpack.c.l.b16 %v86
  %v322 = vunpack.c.h.b16 %v86
  %v323 = vunpack.c.l.b16 %v87
  %v324 = vunpack.c.h.b16 %v87
  %v325 = vunpack.c.l.b16 %v88
  %v326 = vunpack.c.h.b16 %v88
  %v327 = vunpack.c.l.b16 %v89
  %v328 = vunpack.c.h.b16 %v89
  %v329 = vunpack.c.l.b16 %v90
  %v330 = vunpack.c.h.b16 %v90
  %v331 = vunpack.c.l.b16 %v91
  %v332 = vunpack.c.h.b16 %v91
  %v333 = vunpack.c.l.b16 %v92
  %v334 = vunpack.c.h.b16 %v92
  %v335 = vunpack.c.l.b16 %v93
  %v336 = vunpack.c.h.b16 %v93
  %v337 = vunpack.c.l.b16 %v94
  %v338 = vunpack.c.h.b16 %v94
  %v339 = vunpack.c.l.b16 %v95
  %v340 = vunpack.c.h.b16 %v95
  %v341 = vunpack.c.l.b16 %v96
  %v342 = vunpack.c.h.b16 %v96
  %v343 = vunpack.c.l.b16 %v97
  %v344 = vunpack.c.h.b16 %v97
  %v345 = vunpack.c.l.b16 %v98
  %v346 = vunpack.c.h.b16 %v98
  %v347 = vunpack.c.l.b16 %v99
  %v348 = vunpack.c.h.b16 %v99
  %v349 = vunpack.c.l.b16 %v100
  %v350 = vunpack.c.h.b16 %v100
  %v351 = vunpack.c.l.b16 %v101
  %v352 = vunpack.c.h.b16 %v101
  %v353 = vunpack.c.l.b16 %v102
  %v354 = vunpack.c.h.b16 %v102
  %v355 = vunpack.c.l.b16 %v103
  %v356 = vunpack.c.h.b16 %v103
  %v357 = vunpack.c.l.b16 %v104
  %v358 = vunpack.c.h.b16 %v104
  %v359 = vunpack.c.l.b16 %v105
  %v360 = vunpack.c.h.b16 %v105
  %v361 = vunpack.c.l.b16 %v106
  %v362 = vunpack.c.h.b16 %v106
  %v363 = vunpack.c.l.b16 %v107
  %v364 = vunpack.c.h.b16 %v107
  %v365 = vunpack.c.l.b16 %v108
  %v366 = vunpack.c.h.b16 %v108
  %v367 = vunpack.c.l.b16 %v109
  %v368 = vunpack.c.h.b16 %v109
  %v369 = vunpack.c.l.b16 %v110
  %v370 = vunpack.c.h.b16 %v110
  %v371 = vunpack.c.l.b16 %v111
  %v372 = vunpack.c.h.b16 %v111
  %v373 = vunpack.c.l.b16 %v112
  %v374 = vunpack.c.h.b16 %v112
  %v375 = vunpack.c.l.b16 %v113
  %v376 = vunpack.c.h.b16 %v113
  %v377 = vunpack.c.l.b16 %v114
  %v378 = vunpack.c.h.b16 %v114
  %v379 = vunpack.c.l.b16 %v115
  %v380 = vunpack.c.h.b16 %v115
  %v381 = vunpack.c.l.b16 %v116
  %v382 = vunpack.c.h.b16 %v116
  %v383 = vunpack.c.l.b16 %v117
  %v384 = vunpack.c.h.b16 %v117
  %v385 = vunpack.c.l.b16 %v118
  %v386 = vunpack.c.h.b16 %v118
  %v387 = vunpack.c.l.b16 %v119
  %v388 = vunpack.c.h.b16 %v119
  %v389 = vunpack.c.l.b16 %v120
  %v390 = vunpack.c.h.b16 %v120
  %v391 = vunpack.c.l.b16 %v121
  %v392 = vunpack.c.h.b16 %v121
  %v393 = vunpack.c.l.b16 %v122
  %v394 = vunpack.c.h.b16 %v122
  %v395 = vunpack.c.l.b16 %v123
  %v396 = vunpack.c.h.b16 %v123
  %v397 = vunpack.c.l.b16 %v124
  %v398 = vunpack.c.h.b16 %v124
  %v399 = vunpack.c.l.b16 %v125
  %v400 = vunpack.c.h.b16 %v125
  %v401 = vunpack.c.l.b16 %v126
  %v402 = vunpack.c.h.b16 %v126
  %v403 = vunpack.c.l.b16 %v127
  %v404 = vunpack.c.h.b16 %v127
  %v405 = vunpack.c.l.b16 %v128
  %v406 = vunpack.c.h.b16 %v128
  %v407 = vunpack.c.l.b16 %v129
  %v408 = vunpack.c.h.b16 %v129
  %v409 = vunpack.c.l.b16 %v130
  %v410 = vunpack.c.h.b16 %v130
  %v411 = vunpack.c.l.b16 %v131
  %v412 = vunpack.c.h.b16 %v131
  %v413 = vunpack.c.l.b16 %v132
  %v414 = vunpack.c.h.b16 %v132
  %v415 = vunpack.c.l.b16 %v133
  %v416 = vunpack.c.h.b16 %v133
  %v417 = vunpack.c.l.b16 %v134
  %v418 = vunpack.c.h.b16 %v134
  %v419 = vunpack.c.l.b16 %v135
  %v420 = vunpack.c.h.b16 %v135
  %v421 = vunpack.c.l.b16 %v136
  %v422 = vunpack.c.h.b16 %v136
  %v423 = vunpack.c.l.b16 %v137
  %v424 = vunpack.c.h.b16 %v137
  %v425 = vunpack.c.l.b16 %v138
  %v426 = vunpack.c.h.b16 %v138
  %v427 = vunpack.c.l.b16 %v139
  %v428 = vunpack.c.h.b16 %v139
  %v429 = vunpack.c.l.b16 %v140
  %v430 = vunpack.c.h.b16 %v140
  %v431 = vunpack.c.l.b16 %v141
  %v432 = vunpack.c.h.b16 %v141
  %v433 = vunpack.c.l.b16 %v142
  %v434 = vunpack.c.h.b16 %v142
  %v435 = vunpack.c.l.b16 %v143
  %v436 = vunpack.c.h.b16 %v143
  %v437 = vunpack.c.l.b16 %v144
  %v438 = vunpack.c.h.b16 %v144
  %v439 = vunpack.c.l.b16 %v145
  %v440 = vunpack.c.h.b16 %v145
  %v441 = vunpack.c.l.b16 %v146
  %v442 = vunpack.c.h.b16 %v146
  %v443 = vunpack.c.l.b16 %v147
  %v444 = vunpack.c.h.b16 %v147
  %v445 = vunpack.c.l.b16 %v148
  %v446 = vunpack.c.h.b16 %v148
  %v447 = vunpack.c.l.b16 %v149
  %v448 = vunpack.c.h.b16 %v149
  %v449 = vunpack.c.l.b16 %v150
  %v450 = vunpack.c.h.b16 %v150
  %v451 = vunpack.c.l.b16 %v151
  %v452 = vunpack.c.h.b16 %v151
  %v453 = vunpack.c.l.b16 %v152
  %v454 = vunpack.c.h.b16 %v152
  %v455 = vunpack.c.l.b16 %v153
  %v456 = vunpack.c.h.b16 %v153
  %v457 = vunpack.c.l.b16 %v154
  %v458 = vunpack.c.h.b16 %v154
  %v459 = vunpack.c.l.b16 %v155
  %v460 = vunpack.c.h.b16 %v155
  %v461 = vunpack.c.l.b16 %v156
  %v462 = vunpack.c.h.b16 %v156
  %v463 = vpack.c.b16 %v269, %v267
  %v464 = vpack.c.b16 %v270, %v268
  %v465 = vpack.c.b16 %v273, %v271
  %v466 = vpack.c.b16 %v274, %v272
  %v467 = vpack.c.b16 %v277, %v275
  %v468 = vpack.c.b16 %v278, %v276
  %v469 = vpack.c.b16 %v281, %v279
  %v470 = vpack.c.b16 %v282, %v280
  %v471 = vpack.c.b16 %v285, %v283
  %v472 = vpack.c.b16 %v286, %v284
  %v473 = vpack.c.b16 %v289, %v287
  %v474 = vpack.c.b16 %v290, %v288
  %v475 = vpack.c.b16 %v293, %v291
  %v476 = vpack.c.b16 %v294, %v292
  %v477 = vpack.c.b16 %v297, %v295
  %v478 = vpack.c.b16 %v298, %v296
  %v479 = vpack.c.b16 %v301, %v299
  %v480 = vpack.c.b16 %v302, %v300
  %v481 = vpack.c.b16 %v305, %v303
  %v482 = vpack.c.b16 %v306, %v304
  %v483 = vpack.c.b16 %v309, %v307
  %v484 = vpack.c.b16 %v310, %v308
  %v485 = vpack.c.b16 %v313, %v311
  %v486 = vpack.c.b16 %v314, %v312
  %v487 = vpack.c.b16 %v317, %v315
  %v488 = vpack.c.b16 %v318, %v316
  %v489 = vpack.c.b16 %v321, %v319
  %v490 = vpack.c.b16 %v322, %v320
  %v491 = vpack.c.b16 %v325, %v323
  %v492 = vpack.c.b16 %v326, %v324
  %v493 = vpack.c.b16 %v329, %v327
  %v494 = vpack.c.b16 %v330, %v328
  %v495 = vpack.c.b16 %v333, %v331
  %v496 = vpack.c.b16 %v334, %v332
  %v497 = vpack.c.b16 %v337, %v335
  %v498 = vpack.c.b16 %v338, %v336
  %v499 = vpack.c.b16 %v341, %v339
  %v500 = vpack.c.b16 %v342, %v340
  %v501 = vpack.c.b16 %v345, %v343
  %v502 = vpack.c.b16 %v346, %v344
  %v503 = vpack.c.b16 %v349, %v347
  %v504 = vpack.c.b16 %v350, %v348
  %v505 = vpack.c.b16 %v353, %v351
  %v506 = vpack.c.b16 %v354, %v352
  %v507 = vpack.c.b16 %v357, %v355
  %v508 = vpack.c.b16 %v358, %v356
  %v509 = vpack.c.b16 %v361, %v359
  %v510 = vpack.c.b16 %v362, %v360
  %v511 = vpack.c.b16 %v365, %v363
  %v512 = vpack.c.b16 %v366, %v364
  %v513 = vpack.c.b16 %v369, %v367
  %v514 = vpack.c.b16 %v370, %v368
  %v515 = vpack.c.b16 %v373, %v371
  %v516 = vpack.c.b16 %v374, %v372
  %v517 = vpack.c.b16 %v377, %v375
  %v518 = vpack.c.b16 %v378, %v376
  %v519 = vpack.c.b16 %v381, %v379
  %v520 = vpack.c.b16 %v382, %v380
  %v521 = vpack.c.b16 %v385, %v383
  %v522 = vpack.c.b16 %v386, %v384
  %v523 = vpack.c.b16 %v389, %v387
  %v524 = vpack.c.b16 %v390, %v388
  %v525 = vpack.c.b16 %v393, %v391
  %v526 = vpack.c.b16 %v394, %v392
  %v527 = vpack.c.b16 %v397, %v395
  %v528 = vpack.c.b16 %v398, %v396
  %v529 = vpack.c.b16 %v401, %v399
  %v530 = vpack.c.b16 %v402, %v400
  %v531 = vpack.c.b16 %v405, %v403
  %v532 = vpack.c.b16 %v406, %v404
  %v533 = vpack.c.b16 %v409, %v407
  %v534 = vpack.c.b16 %v410, %v408
  %v535 = vpack.c.b16 %v413, %v411
  %v536 = vpack.c.b16 %v414, %v412
  %v537 = vpack.c.b16 %v417, %v415
  %v538 = vpack.c.b16 %v418, %v416
  %v539 = vpack.c.b16 %v421, %v419
  %v540 = vpack.c.b16 %v422, %v420
  %v541 = vpack.c.b16 %v425, %v423
  %v542 = vpack.c.b16 %v426, %v424
  %v543 = vpack.c.b16 %v429, %v427
  %v544 = vpack.c.b16 %v430, %v428
  %v545 = vpack.c.b16 %v433, %v431
  %v546 = vpack.c.b16 %v434, %v432
  %v547 = vpack.c.b16 %v437, %v435
  %v548 = vpack.c.b16 %v438, %v436
  %v549 = vpack.c.b16 %v441, %v439
  %v550 = vpack.c.b16 %v442, %v440
  %v551 = vpack.c.b16 %v445, %v443
  %v552 = vpack.c.b16 %v446, %v444
  %v553 = vpack.c.b16 %v449, %v447
  %v554 = vpack.c.b16 %v450, %v448
  %v555 = vpack.c.b16 %v453, %v451
  %v556 = vpack.c.b16 %v454, %v452
  %v557 = vpack.c.b16 %v457, %v455
  %v558 = vpack.c.b16 %v458, %v456
  %v559 = vpack.c.b16 %v461, %v459
  %v560 = vpack.c.b16 %v462, %v460
  %vm659 = vcmask 130048
  %v661 = vsel %vm659, %v58, 0
  %663 = vmatprep.subr.bf16.mxu0 %v464
  %664 = vmatpush1.bf16.msra.mxu0 %v463
  %665 = vmatprep.subr.bf16.mxu0 %v466
  %666 = vmatpush1.bf16.msra.mxu0 %v465
  %667 = vmatprep.subr.bf16.mxu0 %v468
  %668 = vmatpush1.bf16.msra.mxu0 %v467
  %669 = vmatprep.subr.bf16.mxu0 %v470
  %670 = vmatpush1.bf16.msra.mxu0 %v469
  %671 = vmatprep.subr.bf16.mxu0 %v472
  %672 = vmatpush1.bf16.msra.mxu0 %v471
  %673 = vmatprep.subr.bf16.mxu0 %v474
  %674 = vmatpush1.bf16.msra.mxu0 %v473
  %675 = vmatprep.subr.bf16.mxu0 %v476
  %676 = vmatpush1.bf16.msra.mxu0 %v475
  %677 = vmatprep.subr.bf16.mxu0 %v478
  %678 = vmatpush1.bf16.msra.mxu0 %v477
  %679 = vmatprep.subr.bf16.mxu0 %v480
  %680 = vmatpush1.bf16.msra.mxu0 %v479
  %681 = vmatprep.subr.bf16.mxu0 %v482
  %682 = vmatpush1.bf16.msra.mxu0 %v481
  %683 = vmatprep.subr.bf16.mxu0 %v484
  %684 = vmatpush1.bf16.msra.mxu0 %v483
  %685 = vmatprep.subr.bf16.mxu0 %v486
  %686 = vmatpush1.bf16.msra.mxu0 %v485
  %687 = vmatprep.subr.bf16.mxu0 %v488
  %688 = vmatpush1.bf16.msra.mxu0 %v487
  %689 = vmatprep.subr.bf16.mxu0 %v490
  %690 = vmatpush1.bf16.msra.mxu0 %v489
  %691 = vmatprep.subr.bf16.mxu0 %v492
  %692 = vmatpush1.bf16.msra.mxu0 %v491
  %693 = vmatprep.subr.bf16.mxu0 %v494
  %694 = vmatpush1.bf16.msra.mxu0 %v493
  %695 = vmatprep.mubr.bf16.mxu0 %v53
  %696 = vmatmul.mubr.bf16.gmra.mrb[0].mxu0 %v52
  %v697 = vpop.f32.mrb[0].mxu0
  %v698 = vadd.f32 %v162, %v697
  %v699 = vpop.f32.mrb[0].mxu0
  %v700 = vadd.f32 %v166, %v699
  %v701 = vpop.f32.mrb[0].mxu0
  %v702 = vpop.f32.mrb[0].mxu0
  %703 = vdwg.mxu0
  %704 = vmatprep.subr.bf16.mxu0 %v496
  %705 = vmatpush1.bf16.msra.mxu0 %v495
  %706 = vmatprep.subr.bf16.mxu0 %v498
  %707 = vmatpush1.bf16.msra.mxu0 %v497
  %708 = vmatprep.subr.bf16.mxu0 %v500
  %709 = vmatpush1.bf16.msra.mxu0 %v499
  %710 = vmatprep.subr.bf16.mxu0 %v502
  %711 = vmatpush1.bf16.msra.mxu0 %v501
  %712 = vmatprep.subr.bf16.mxu0 %v504
  %713 = vmatpush1.bf16.msra.mxu0 %v503
  %714 = vmatprep.subr.bf16.mxu0 %v506
  %715 = vmatpush1.bf16.msra.mxu0 %v505
  %716 = vmatprep.subr.bf16.mxu0 %v508
  %717 = vmatpush1.bf16.msra.mxu0 %v507
  %718 = vmatprep.subr.bf16.mxu0 %v510
  %719 = vmatpush1.bf16.msra.mxu0 %v509
  %720 = vmatprep.subr.bf16.mxu0 %v512
  %721 = vmatpush1.bf16.msra.mxu0 %v511
  %722 = vmatprep.subr.bf16.mxu0 %v514
  %723 = vmatpush1.bf16.msra.mxu0 %v513
  %724 = vmatprep.subr.bf16.mxu0 %v516
  %725 = vmatpush1.bf16.msra.mxu0 %v515
  %726 = vmatprep.subr.bf16.mxu0 %v518
  %727 = vmatpush1.bf16.msra.mxu0 %v517
  %728 = vmatprep.subr.bf16.mxu0 %v520
  %729 = vmatpush1.bf16.msra.mxu0 %v519
  %730 = vmatprep.subr.bf16.mxu0 %v522
  %731 = vmatpush1.bf16.msra.mxu0 %v521
  %732 = vmatprep.subr.bf16.mxu0 %v524
  %733 = vmatpush1.bf16.msra.mxu0 %v523
  %734 = vmatprep.subr.bf16.mxu0 %v526
  %735 = vmatpush1.bf16.msra.mxu0 %v525
  %736 = vmatprep.mubr.bf16.mxu0 %v55
  %737 = vmatmul.mubr.bf16.gmra.mrb[0].mxu0 %v54
  %v738 = vpop.f32.mrb[0].mxu0
  %v739 = vadd.f32 %v698, %v738
  %v740 = vpop.f32.mrb[0].mxu0
  %v741 = vadd.f32 %v700, %v740
  %v742 = vpop.f32.mrb[0].mxu0
  %v743 = vpop.f32.mrb[0].mxu0
  %744 = vdwg.mxu0
  %745 = vmatprep.subr.bf16.mxu0 %v528
  %746 = vmatpush1.bf16.msra.mxu0 %v527
  %747 = vmatprep.subr.bf16.mxu0 %v530
  %748 = vmatpush1.bf16.msra.mxu0 %v529
  %749 = vmatprep.subr.bf16.mxu0 %v532
  %750 = vmatpush1.bf16.msra.mxu0 %v531
  %751 = vmatprep.subr.bf16.mxu0 %v534
  %752 = vmatpush1.bf16.msra.mxu0 %v533
  %753 = vmatprep.subr.bf16.mxu0 %v536
  %754 = vmatpush1.bf16.msra.mxu0 %v535
  %755 = vmatprep.subr.bf16.mxu0 %v538
  %756 = vmatpush1.bf16.msra.mxu0 %v537
  %757 = vmatprep.subr.bf16.mxu0 %v540
  %758 = vmatpush1.bf16.msra.mxu0 %v539
  %759 = vmatprep.subr.bf16.mxu0 %v542
  %760 = vmatpush1.bf16.msra.mxu0 %v541
  %761 = vmatprep.subr.bf16.mxu0 %v544
  %762 = vmatpush1.bf16.msra.mxu0 %v543
  %763 = vmatprep.subr.bf16.mxu0 %v546
  %764 = vmatpush1.bf16.msra.mxu0 %v545
  %765 = vmatprep.subr.bf16.mxu0 %v548
  %766 = vmatpush1.bf16.msra.mxu0 %v547
  %767 = vmatprep.subr.bf16.mxu0 %v550
  %768 = vmatpush1.bf16.msra.mxu0 %v549
  %769 = vmatprep.subr.bf16.mxu0 %v552
  %770 = vmatpush1.bf16.msra.mxu0 %v551
  %771 = vmatprep.subr.bf16.mxu0 %v554
  %772 = vmatpush1.bf16.msra.mxu0 %v553
  %773 = vmatprep.subr.bf16.mxu0 %v556
  %774 = vmatpush1.bf16.msra.mxu0 %v555
  %775 = vmatprep.subr.bf16.mxu0 %v558
  %776 = vmatpush1.bf16.msra.mxu0 %v557
  %777 = vmatprep.mubr.bf16.mxu0 %v57
  %778 = vmatmul.mubr.bf16.gmra.mrb[0].mxu0 %v56
  %v779 = vpop.f32.mrb[0].mxu0
  %v780 = vadd.f32 %v739, %v779
  %v781 = vpop.f32.mrb[0].mxu0
  %v782 = vadd.f32 %v741, %v781
  %v783 = vpop.f32.mrb[0].mxu0
  %v784 = vpop.f32.mrb[0].mxu0
  %785 = vdwg.mxu0
  %786 = vmatprep.subr.bf16.mxu0 %v560
  %787 = vmatpush1.bf16.msra.mxu0 %v559
  %788 = vmatprep.subr.bf16.mxu0 0
  %789 = vmatpush1.bf16.msra.mxu0 0
  %790 = vmatprep.subr.bf16.mxu0 0
  %791 = vmatpush1.bf16.msra.mxu0 0
  %792 = vmatprep.subr.bf16.mxu0 0
  %793 = vmatpush1.bf16.msra.mxu0 0
  %794 = vmatprep.subr.bf16.mxu0 0
  %795 = vmatpush1.bf16.msra.mxu0 0
  %796 = vmatprep.subr.bf16.mxu0 0
  %797 = vmatpush1.bf16.msra.mxu0 0
  %798 = vmatprep.subr.bf16.mxu0 0
  %799 = vmatpush1.bf16.msra.mxu0 0
  %800 = vmatprep.subr.bf16.mxu0 0
  %801 = vmatpush1.bf16.msra.mxu0 0
  %802 = vmatprep.subr.bf16.mxu0 0
  %803 = vmatpush1.bf16.msra.mxu0 0
  %804 = vmatprep.subr.bf16.mxu0 0
  %805 = vmatpush1.bf16.msra.mxu0 0
  %806 = vmatprep.subr.bf16.mxu0 0
  %807 = vmatpush1.bf16.msra.mxu0 0
  %808 = vmatprep.subr.bf16.mxu0 0
  %809 = vmatpush1.bf16.msra.mxu0 0
  %810 = vmatprep.subr.bf16.mxu0 0
  %811 = vmatpush1.bf16.msra.mxu0 0
  %812 = vmatprep.subr.bf16.mxu0 0
  %813 = vmatpush1.bf16.msra.mxu0 0
  %814 = vmatprep.subr.bf16.mxu0 0
  %815 = vmatpush1.bf16.msra.mxu0 0
  %816 = vmatprep.subr.bf16.mxu0 0
  %817 = vmatpush1.bf16.msra.mxu0 0
  %818 = vmatprep.mubr.bf16.mxu0 0
  %819 = vmatmul.mubr.bf16.gmra.mrb[0].mxu0 %v661
  %v820 = vpop.f32.mrb[0].mxu0
  %v821 = vadd.f32 %v780, %v820
  %v822 = vpop.f32.mrb[0].mxu0
  %v823 = vadd.f32 %v782, %v822
  %v824 = vpop.f32.mrb[0].mxu0
  %v825 = vpop.f32.mrb[0].mxu0
  %826 = vdwg.mxu0
  %v827 = vmax.f32 %v821, 0.0
  %v828 = vmax.f32 %v823, 0.0
  %v829 = vpack.c.bf16 %v827, %v827
  %v830 = vpack.c.bf16 %v828, %v828
  %v831 = vld [vmem:[%s3] sm:$0xf]
  %v832 = vld [vmem:[%s3 + $0x4] sm:$0xf]
  %v833 = vld [vmem:[%s3 + $0x8] sm:$0xf]
  %v834 = vld [vmem:[%s3 + $0xc] sm:$0xf]
  %v835 = vld [vmem:[%s3 + $0x10] sm:$0xf]
  %v836 = vld [vmem:[%s3 + $0x14] sm:$0xf]
  %v837 = vld [vmem:[%s3 + $0x18] sm:$0xf]
  %v838 = vld [vmem:[%s3 + $0x1c] sm:$0xf]
  %v839 = vld [vmem:[%s3 + $0x20] sm:$0xf]
  %v840 = vld [vmem:[%s3 + $0x24] sm:$0xf]
  %v841 = vld [vmem:[%s3 + $0x28] sm:$0xf]
  %v842 = vld [vmem:[%s3 + $0x2c] sm:$0xf]
  %v843 = vld [vmem:[%s3 + $0x30] sm:$0xf]
  %v844 = vld [vmem:[%s3 + $0x34] sm:$0xf]
  %v845 = vld [vmem:[%s3 + $0x38] sm:$0xf]
  %v846 = vld [vmem:[%s3 + $0x3c] sm:$0xf]
  %v847 = vld [vmem:[%s3 + $0x40] sm:$0xf]
  %v848 = vld [vmem:[%s3 + $0x44] sm:$0xf]
  %v849 = vld [vmem:[%s3 + $0x48] sm:$0xf]
  %v850 = vld [vmem:[%s3 + $0x4c] sm:$0xf]
  %v851 = vld [vmem:[%s3 + $0x50] sm:$0xf]
  %v852 = vld [vmem:[%s3 + $0x54] sm:$0xf]
  %v853 = vld [vmem:[%s3 + $0x58] sm:$0xf]
  %v854 = vld [vmem:[%s3 + $0x5c] sm:$0xf]
  %v855 = vld [vmem:[%s3 + $0x60] sm:$0xf]
  %v856 = vld [vmem:[%s3 + $0x64] sm:$0xf]
  %v857 = vld [vmem:[%s3 + $0x68] sm:$0xf]
  %v858 = vld [vmem:[%s3 + $0x6c] sm:$0xf]
  %v859 = vld [vmem:[%s3 + $0x70] sm:$0xf]
  %v860 = vld [vmem:[%s3 + $0x74] sm:$0xf]
  %v861 = vld [vmem:[%s3 + $0x78] sm:$0xf]
  %v862 = vld [vmem:[%s3 + $0x7c] sm:$0xf]
  %v863 = vld [vmem:[%s4] sm:$0x1]
  %v865 = vlaneseq
  %v866 = vshrl.u32 %v865, 7
  %v867 = vsub.s32 0, %v866
  %v868 = vrot.slane %v863, %v867
  %v902 = vunpack.c.l.b16 %v831
  %v903 = vunpack.c.l.b16 %v832
  %v904 = vunpack.c.l.b16 %v833
  %v905 = vunpack.c.l.b16 %v834
  %v906 = vunpack.c.l.b16 %v835
  %v907 = vunpack.c.l.b16 %v836
  %v908 = vunpack.c.l.b16 %v837
  %v909 = vunpack.c.l.b16 %v838
  %v910 = vunpack.c.l.b16 %v839
  %v911 = vunpack.c.l.b16 %v840
  %v912 = vunpack.c.l.b16 %v841
  %v913 = vunpack.c.l.b16 %v842
  %v914 = vunpack.c.l.b16 %v843
  %v915 = vunpack.c.l.b16 %v844
  %v916 = vunpack.c.l.b16 %v845
  %v917 = vunpack.c.l.b16 %v846
  %v918 = vunpack.c.l.b16 %v847
  %v919 = vunpack.c.l.b16 %v848
  %v920 = vunpack.c.l.b16 %v849
  %v921 = vunpack.c.l.b16 %v850
  %v922 = vunpack.c.l.b16 %v851
  %v923 = vunpack.c.l.b16 %v852
  %v924 = vunpack.c.l.b16 %v853
  %v925 = vunpack.c.l.b16 %v854
  %v926 = vunpack.c.l.b16 %v855
  %v927 = vunpack.c.l.b16 %v856
  %v928 = vunpack.c.l.b16 %v857
  %v929 = vunpack.c.l.b16 %v858
  %v930 = vunpack.c.l.b16 %v859
  %v931 = vunpack.c.l.b16 %v860
  %v932 = vunpack.c.l.b16 %v861
  %v933 = vunpack.c.l.b16 %v862
  %v934 = vpack.c.b16 %v903, %v902
  %v935 = vpack.c.b16 %v905, %v904
  %v936 = vpack.c.b16 %v907, %v906
  %v937 = vpack.c.b16 %v909, %v908
  %v938 = vpack.c.b16 %v911, %v910
  %v939 = vpack.c.b16 %v913, %v912
  %v940 = vpack.c.b16 %v915, %v914
  %v941 = vpack.c.b16 %v917, %v916
  %v942 = vpack.c.b16 %v919, %v918
  %v943 = vpack.c.b16 %v921, %v920
  %v944 = vpack.c.b16 %v923, %v922
  %v945 = vpack.c.b16 %v925, %v924
  %v946 = vpack.c.b16 %v927, %v926
  %v947 = vpack.c.b16 %v929, %v928
  %v948 = vpack.c.b16 %v931, %v930
  %v949 = vpack.c.b16 %v933, %v932
  %966 = vmatprep.subr.bf16.mxu0 0
  %967 = vmatpush1.bf16.msra.mxu0 %v934
  %968 = vmatprep.subr.bf16.mxu0 0
  %969 = vmatpush1.bf16.msra.mxu0 %v935
  %970 = vmatprep.subr.bf16.mxu0 0
  %971 = vmatpush1.bf16.msra.mxu0 %v936
  %972 = vmatprep.subr.bf16.mxu0 0
  %973 = vmatpush1.bf16.msra.mxu0 %v937
  %974 = vmatprep.subr.bf16.mxu0 0
  %975 = vmatpush1.bf16.msra.mxu0 %v938
  %976 = vmatprep.subr.bf16.mxu0 0
  %977 = vmatpush1.bf16.msra.mxu0 %v939
  %978 = vmatprep.subr.bf16.mxu0 0
  %979 = vmatpush1.bf16.msra.mxu0 %v940
  %980 = vmatprep.subr.bf16.mxu0 0
  %981 = vmatpush1.bf16.msra.mxu0 %v941
  %982 = vmatprep.subr.bf16.mxu0 0
  %983 = vmatpush1.bf16.msra.mxu0 %v942
  %984 = vmatprep.subr.bf16.mxu0 0
  %985 = vmatpush1.bf16.msra.mxu0 %v943
  %986 = vmatprep.subr.bf16.mxu0 0
  %987 = vmatpush1.bf16.msra.mxu0 %v944
  %988 = vmatprep.subr.bf16.mxu0 0
  %989 = vmatpush1.bf16.msra.mxu0 %v945
  %990 = vmatprep.subr.bf16.mxu0 0
  %991 = vmatpush1.bf16.msra.mxu0 %v946
  %992 = vmatprep.subr.bf16.mxu0 0
  %993 = vmatpush1.bf16.msra.mxu0 %v947
  %994 = vmatprep.subr.bf16.mxu0 0
  %995 = vmatpush1.bf16.msra.mxu0 %v948
  %996 = vmatprep.subr.bf16.mxu0 0
  %997 = vmatpush1.bf16.msra.mxu0 %v949
  %998 = vmatprep.mubr.bf16.mxu0 %v830
  %999 = vmatmul.mubr.bf16.gmra.mrb[0].mxu0 %v829
  %v1000 = vpop.f32.mrb[0].mxu0
  %v1001 = vadd.f32 %v868, %v1000
  %v1002 = vpop.f32.mrb[0].mxu0
  %v1003 = vpop.f32.mrb[0].mxu0
  %v1004 = vpop.f32.mrb[0].mxu0
  %1005 = vdwg.mxu0
  %v1006 = vmax.f32 %v1001, 0.0
  %v1007 = vpack.c.bf16 %v1006, %v1006
  %v1008 = vld [vmem:[%s5] sm:$0xf]
  %v1009 = vld [vmem:[%s5 + $0x4] sm:$0xf]
  %v1010 = vld [vmem:[%s5 + $0x8] sm:$0xf]
  %v1011 = vld [vmem:[%s5 + $0xc] sm:$0xf]
  %v1012 = vld [vmem:[%s5 + $0x10] sm:$0xf]
  %v1013 = vld [vmem:[%s5 + $0x14] sm:$0xf]
  %v1014 = vld [vmem:[%s5 + $0x18] sm:$0xf]
  %v1015 = vld [vmem:[%s5 + $0x1c] sm:$0xf]
  %v1016 = vld [vmem:[%s6] sm:$0x1]
  %v1018 = vlaneseq
  %v1019 = vshrl.u32 %v1018, 7
  %v1020 = vsub.s32 0, %v1019
  %v1021 = vrot.slane %v1016, %v1020
  %v1031 = vunpack.c.l.b16 %v1008
  %v1032 = vunpack.c.l.b16 %v1009
  %v1033 = vunpack.c.l.b16 %v1010
  %v1034 = vunpack.c.l.b16 %v1011
  %v1035 = vunpack.c.l.b16 %v1012
  %v1036 = vunpack.c.l.b16 %v1013
  %v1037 = vunpack.c.l.b16 %v1014
  %v1038 = vunpack.c.l.b16 %v1015
  %v1039 = vpack.c.b16 %v1032, %v1031
  %v1040 = vpack.c.b16 %v1034, %v1033
  %v1041 = vpack.c.b16 %v1036, %v1035
  %v1042 = vpack.c.b16 %v1038, %v1037
  %vm1047 = vcmask 523264
  %v1049 = vsel %vm1047, %v1007, 0
  %1051 = vmatprep.subr.bf16.mxu0 0
  %1052 = vmatpush1.bf16.msra.mxu0 %v1039
  %1053 = vmatprep.subr.bf16.mxu0 0
  %1054 = vmatpush1.bf16.msra.mxu0 %v1040
  %1055 = vmatprep.subr.bf16.mxu0 0
  %1056 = vmatpush1.bf16.msra.mxu0 %v1041
  %1057 = vmatprep.subr.bf16.mxu0 0
  %1058 = vmatpush1.bf16.msra.mxu0 %v1042
  %1059 = vmatprep.subr.bf16.mxu0 0
  %1060 = vmatpush1.bf16.msra.mxu0 0
  %1061 = vmatprep.subr.bf16.mxu0 0
  %1062 = vmatpush1.bf16.msra.mxu0 0
  %1063 = vmatprep.subr.bf16.mxu0 0
  %1064 = vmatpush1.bf16.msra.mxu0 0
  %1065 = vmatprep.subr.bf16.mxu0 0
  %1066 = vmatpush1.bf16.msra.mxu0 0
  %1067 = vmatprep.subr.bf16.mxu0 0
  %1068 = vmatpush1.bf16.msra.mxu0 0
  %1069 = vmatprep.subr.bf16.mxu0 0
  %1070 = vmatpush1.bf16.msra.mxu0 0
  %1071 = vmatprep.subr.bf16.mxu0 0
  %1072 = vmatpush1.bf16.msra.mxu0 0
  %1073 = vmatprep.subr.bf16.mxu0 0
  %1074 = vmatpush1.bf16.msra.mxu0 0
  %1075 = vmatprep.subr.bf16.mxu0 0
  %1076 = vmatpush1.bf16.msra.mxu0 0
  %1077 = vmatprep.subr.bf16.mxu0 0
  %1078 = vmatpush1.bf16.msra.mxu0 0
  %1079 = vmatprep.subr.bf16.mxu0 0
  %1080 = vmatpush1.bf16.msra.mxu0 0
  %1081 = vmatprep.subr.bf16.mxu0 0
  %1082 = vmatpush1.bf16.msra.mxu0 0
  %1083 = vmatprep.mubr.bf16.mxu0 0
  %1084 = vmatmul.mubr.bf16.gmra.mrb[0].mxu0 %v1049
  %v1085 = vpop.f32.mrb[0].mxu0
  %v1086 = vadd.f32 %v1021, %v1085
  %v1087 = vpop.f32.mrb[0].mxu0
  %v1088 = vpop.f32.mrb[0].mxu0
  %v1089 = vpop.f32.mrb[0].mxu0
  %1090 = vdwg.mxu0
  %v1091 = vmax.f32 %v1086, 0.0
  %v1092 = vpack.c.bf16 %v1091, %v1091
  %v1093 = vld [vmem:[%s7] sm:$0xf]
  %v1094 = vld [vmem:[%s7 + $0x4] sm:$0xf]
  %v1095 = vld [vmem:[%s7 + $0x8] sm:$0x3]
  %v1096 = vld [vmem:[%s8] sm:$0x1]
  %v1098 = vlaneseq
  %v1099 = vshrl.u32 %v1098, 7
  %v1100 = vsub.s32 0, %v1099
  %v1101 = vrot.slane %v1096, %v1100
  %v1106 = vunpack.c.l.b16 %v1093
  %v1107 = vunpack.c.l.b16 %v1094
  %v1108 = vunpack.c.l.b16 %v1095
  %v1109 = vpack.c.b16 %v1107, %v1106
  %v1110 = vpack.c.b16 %v1108, %v1108
  %vm1112 = vcmask 162816
  %v1114 = vsel %vm1112, %v1092, 0
  %vm1116 = vcmask 1041408
  %v1118 = vsel %vm1116, %v1110, 0
  %1120 = vmatprep.subr.bf16.mxu0 0
  %1121 = vmatpush1.bf16.msra.mxu0 %v1109
  %1122 = vmatprep.subr.bf16.mxu0 0
  %1123 = vmatpush1.bf16.msra.mxu0 %v1118
  %1124 = vmatprep.subr.bf16.mxu0 0
  %1125 = vmatpush1.bf16.msra.mxu0 0
  %1126 = vmatprep.subr.bf16.mxu0 0
  %1127 = vmatpush1.bf16.msra.mxu0 0
  %1128 = vmatprep.subr.bf16.mxu0 0
  %1129 = vmatpush1.bf16.msra.mxu0 0
  %1130 = vmatprep.subr.bf16.mxu0 0
  %1131 = vmatpush1.bf16.msra.mxu0 0
  %1132 = vmatprep.subr.bf16.mxu0 0
  %1133 = vmatpush1.bf16.msra.mxu0 0
  %1134 = vmatprep.subr.bf16.mxu0 0
  %1135 = vmatpush1.bf16.msra.mxu0 0
  %1136 = vmatprep.subr.bf16.mxu0 0
  %1137 = vmatpush1.bf16.msra.mxu0 0
  %1138 = vmatprep.subr.bf16.mxu0 0
  %1139 = vmatpush1.bf16.msra.mxu0 0
  %1140 = vmatprep.subr.bf16.mxu0 0
  %1141 = vmatpush1.bf16.msra.mxu0 0
  %1142 = vmatprep.subr.bf16.mxu0 0
  %1143 = vmatpush1.bf16.msra.mxu0 0
  %1144 = vmatprep.subr.bf16.mxu0 0
  %1145 = vmatpush1.bf16.msra.mxu0 0
  %1146 = vmatprep.subr.bf16.mxu0 0
  %1147 = vmatpush1.bf16.msra.mxu0 0
  %1148 = vmatprep.subr.bf16.mxu0 0
  %1149 = vmatpush1.bf16.msra.mxu0 0
  %1150 = vmatprep.subr.bf16.mxu0 0
  %1151 = vmatpush1.bf16.msra.mxu0 0
  %1152 = vmatprep.mubr.bf16.mxu0 0
  %1153 = vmatmul.mubr.bf16.gmra.mrb[0].mxu0 %v1114
  %v1154 = vpop.f32.mrb[0].mxu0
  %v1155 = vadd.f32 %v1101, %v1154
  %v1156 = vpop.f32.mrb[0].mxu0
  %v1157 = vpop.f32.mrb[0].mxu0
  %v1158 = vpop.f32.mrb[0].mxu0
  %1159 = vdwg.mxu0
  %v1160 = vmax.f32 %v1155, 0.0
  %v1161 = vpack.c.bf16 %v1160, %v1160
  %v1162 = vld [vmem:[%s9] sm:$0xff]
  %v1163 = vld [vmem:[%s9 + $0x8] sm:$0xff]
  %v1164 = vld [vmem:[%s9 + $0x10] sm:$0xff]
  %v1165 = vld [vmem:[%s9 + $0x18] sm:$0xff]
  %v1166 = vld [vmem:[%s9 + $0x20] sm:$0xff]
  %v1167 = vld [vmem:[%s9 + $0x28] sm:$0xff]
  %v1168 = vld [vmem:[%s9 + $0x30] sm:$0xff]
  %v1169 = vld [vmem:[%s9 + $0x38] sm:$0xff]
  %v1170 = vld [vmem:[%s10] sm:$0x3]
  %v1172 = vlaneseq
  %v1173 = vshrl.u32 %v1172, 7
  %v1174 = vsub.s32 0, %v1173
  %v1175 = vrot.slane %v1170, %v1174
  %v1176 = vlaneseq
  %v1177 = vshrl.u32 %v1176, 7
  %v1178 = vsub.s32 1, %v1177
  %v1179 = vrot.slane %v1170, %v1178
  %v1190 = vunpack.c.l.b16 %v1162
  %v1191 = vunpack.c.h.b16 %v1162
  %v1192 = vunpack.c.l.b16 %v1163
  %v1193 = vunpack.c.h.b16 %v1163
  %v1194 = vunpack.c.l.b16 %v1164
  %v1195 = vunpack.c.h.b16 %v1164
  %v1196 = vunpack.c.l.b16 %v1165
  %v1197 = vunpack.c.h.b16 %v1165
  %v1198 = vunpack.c.l.b16 %v1166
  %v1199 = vunpack.c.h.b16 %v1166
  %v1200 = vunpack.c.l.b16 %v1167
  %v1201 = vunpack.c.h.b16 %v1167
  %v1202 = vunpack.c.l.b16 %v1168
  %v1203 = vunpack.c.h.b16 %v1168
  %v1204 = vunpack.c.l.b16 %v1169
  %v1205 = vunpack.c.h.b16 %v1169
  %v1206 = vpack.c.b16 %v1192, %v1190
  %v1207 = vpack.c.b16 %v1193, %v1191
  %v1208 = vpack.c.b16 %v1196, %v1194
  %v1209 = vpack.c.b16 %v1197, %v1195
  %v1210 = vpack.c.b16 %v1200, %v1198
  %v1211 = vpack.c.b16 %v1201, %v1199
  %v1212 = vpack.c.b16 %v1204, %v1202
  %v1213 = vpack.c.b16 %v1205, %v1203
  %v1223 = vsel %vm1047, %v1161, 0
  %1225 = vmatprep.subr.bf16.mxu0 %v1207
  %1226 = vmatpush1.bf16.msra.mxu0 %v1206
  %1227 = vmatprep.subr.bf16.mxu0 %v1209
  %1228 = vmatpush1.bf16.msra.mxu0 %v1208
  %1229 = vmatprep.subr.bf16.mxu0 %v1211
  %1230 = vmatpush1.bf16.msra.mxu0 %v1210
  %1231 = vmatprep.subr.bf16.mxu0 %v1213
  %1232 = vmatpush1.bf16.msra.mxu0 %v1212
  %1233 = vmatprep.subr.bf16.mxu0 0
  %1234 = vmatpush1.bf16.msra.mxu0 0
  %1235 = vmatprep.subr.bf16.mxu0 0
  %1236 = vmatpush1.bf16.msra.mxu0 0
  %1237 = vmatprep.subr.bf16.mxu0 0
  %1238 = vmatpush1.bf16.msra.mxu0 0
  %1239 = vmatprep.subr.bf16.mxu0 0
  %1240 = vmatpush1.bf16.msra.mxu0 0
  %1241 = vmatprep.subr.bf16.mxu0 0
  %1242 = vmatpush1.bf16.msra.mxu0 0
  %1243 = vmatprep.subr.bf16.mxu0 0
  %1244 = vmatpush1.bf16.msra.mxu0 0
  %1245 = vmatprep.subr.bf16.mxu0 0
  %1246 = vmatpush1.bf16.msra.mxu0 0
  %1247 = vmatprep.subr.bf16.mxu0 0
  %1248 = vmatpush1.bf16.msra.mxu0 0
  %1249 = vmatprep.subr.bf16.mxu0 0
  %1250 = vmatpush1.bf16.msra.mxu0 0
  %1251 = vmatprep.subr.bf16.mxu0 0
  %1252 = vmatpush1.bf16.msra.mxu0 0
  %1253 = vmatprep.subr.bf16.mxu0 0
  %1254 = vmatpush1.bf16.msra.mxu0 0
  %1255 = vmatprep.subr.bf16.mxu0 0
  %1256 = vmatpush1.bf16.msra.mxu0 0
  %1257 = vmatprep.mubr.bf16.mxu0 0
  %1258 = vmatmul.mubr.bf16.gmra.mrb[0].mxu0 %v1223
  %v1259 = vpop.f32.mrb[0].mxu0
  %v1260 = vadd.f32 %v1175, %v1259
  %v1261 = vpop.f32.mrb[0].mxu0
  %v1262 = vadd.f32 %v1179, %v1261
  %v1263 = vpop.f32.mrb[0].mxu0
  %v1264 = vpop.f32.mrb[0].mxu0
  %1265 = vdwg.mxu0
  %v1266 = vmax.f32 %v1260, 0.0
  %v1267 = vmax.f32 %v1262, 0.0
  %v1268 = vpack.c.bf16 %v1266, %v1266
  %v1269 = vpack.c.bf16 %v1267, %v1267
  %v1270 = vld [vmem:[%s11] sm:$0xff]
  %v1271 = vld [vmem:[%s11 + $0x8] sm:$0xff]
  %v1272 = vld [vmem:[%s11 + $0x10] sm:$0xff]
  %v1273 = vld [vmem:[%s11 + $0x18] sm:$0xf]
  %v1274 = vld [vmem:[%s11 + $0x1c] sm:$0xff]
  %v1275 = vld [vmem:[%s11 + $0x24] sm:$0xff]
  %v1276 = vld [vmem:[%s11 + $0x2c] sm:$0xff]
  %v1277 = vld [vmem:[%s11 + $0x34] sm:$0xf]
  %v1278 = vld [vmem:[%s11 + $0x38] sm:$0xff]
  %v1279 = vld [vmem:[%s11 + $0x40] sm:$0xff]
  %v1280 = vld [vmem:[%s11 + $0x48] sm:$0xff]
  %v1281 = vld [vmem:[%s11 + $0x50] sm:$0xf]
  %v1282 = vld [vmem:[%s11 + $0x54] sm:$0xff]
  %v1283 = vld [vmem:[%s11 + $0x5c] sm:$0xff]
  %v1284 = vld [vmem:[%s11 + $0x64] sm:$0xff]
  %v1285 = vld [vmem:[%s11 + $0x6c] sm:$0xf]
  %v1286 = vld [vmem:[%s11 + $0x70] sm:$0xff]
  %v1287 = vld [vmem:[%s11 + $0x78] sm:$0xff]
  %v1288 = vld [vmem:[%s11 + $0x80] sm:$0xff]
  %v1289 = vld [vmem:[%s11 + $0x88] sm:$0xf]
  %v1290 = vld [vmem:[%s11 + $0x8c] sm:$0xff]
  %v1291 = vld [vmem:[%s11 + $0x94] sm:$0xff]
  %v1292 = vld [vmem:[%s11 + $0x9c] sm:$0xff]
  %v1293 = vld [vmem:[%s11 + $0xa4] sm:$0xf]
  %v1294 = vld [vmem:[%s11 + $0xa8] sm:$0xff]
  %v1295 = vld [vmem:[%s11 + $0xb0] sm:$0xff]
  %v1296 = vld [vmem:[%s11 + $0xb8] sm:$0xff]
  %v1297 = vld [vmem:[%s11 + $0xc0] sm:$0xf]
  %v1298 = vld [vmem:[%s11 + $0xc4] sm:$0xff]
  %v1299 = vld [vmem:[%s11 + $0xcc] sm:$0xff]
  %v1300 = vld [vmem:[%s11 + $0xd4] sm:$0xff]
  %v1301 = vld [vmem:[%s11 + $0xdc] sm:$0xf]
  %v1302 = vld [vmem:[%s11 + $0xe0] sm:$0xff]
  %v1303 = vld [vmem:[%s11 + $0xe8] sm:$0xff]
  %v1304 = vld [vmem:[%s11 + $0xf0] sm:$0xff]
  %v1305 = vld [vmem:[%s11 + $0xf8] sm:$0xf]
  %v1306 = vld [vmem:[%s11 + $0xfc] sm:$0xff]
  %v1307 = vld [vmem:[%s11 + $0x104] sm:$0xff]
  %v1308 = vld [vmem:[%s11 + $0x10c] sm:$0xff]
  %v1309 = vld [vmem:[%s11 + $0x114] sm:$0xf]
  %v1310 = vld [vmem:[%s11 + $0x118] sm:$0xff]
  %v1311 = vld [vmem:[%s11 + $0x120] sm:$0xff]
  %v1312 = vld [vmem:[%s11 + $0x128] sm:$0xff]
  %v1313 = vld [vmem:[%s11 + $0x130] sm:$0xf]
  %v1314 = vld [vmem:[%s11 + $0x134] sm:$0xff]
  %v1315 = vld [vmem:[%s11 + $0x13c] sm:$0xff]
  %v1316 = vld [vmem:[%s11 + $0x144] sm:$0xff]
  %v1317 = vld [vmem:[%s11 + $0x14c] sm:$0xf]
  %v1318 = vld [vmem:[%s11 + $0x150] sm:$0xff]
  %v1319 = vld [vmem:[%s11 + $0x158] sm:$0xff]
  %v1320 = vld [vmem:[%s11 + $0x160] sm:$0xff]
  %v1321 = vld [vmem:[%s11 + $0x168] sm:$0xf]
  %v1322 = vld [vmem:[%s11 + $0x16c] sm:$0xff]
  %v1323 = vld [vmem:[%s11 + $0x174] sm:$0xff]
  %v1324 = vld [vmem:[%s11 + $0x17c] sm:$0xff]
  %v1325 = vld [vmem:[%s11 + $0x184] sm:$0xf]
  %v1326 = vld [vmem:[%s11 + $0x188] sm:$0xff]
  %v1327 = vld [vmem:[%s11 + $0x190] sm:$0xff]
  %v1328 = vld [vmem:[%s11 + $0x198] sm:$0xff]
  %v1329 = vld [vmem:[%s11 + $0x1a0] sm:$0xf]
  %v1330 = vld [vmem:[%s11 + $0x1a4] sm:$0xff]
  %v1331 = vld [vmem:[%s11 + $0x1ac] sm:$0xff]
  %v1332 = vld [vmem:[%s11 + $0x1b4] sm:$0xff]
  %v1333 = vld [vmem:[%s11 + $0x1bc] sm:$0xf]
  %v1334 = vld [vmem:[%s11 + $0x1c0] sm:$0xff]
  %v1335 = vld [vmem:[%s11 + $0x1c8] sm:$0xff]
  %v1336 = vld [vmem:[%s11 + $0x1d0] sm:$0xff]
  %v1337 = vld [vmem:[%s11 + $0x1d8] sm:$0xf]
  %v1338 = vld [vmem:[%s11 + $0x1dc] sm:$0xff]
  %v1339 = vld [vmem:[%s11 + $0x1e4] sm:$0xff]
  %v1340 = vld [vmem:[%s11 + $0x1ec] sm:$0xff]
  %v1341 = vld [vmem:[%s11 + $0x1f4] sm:$0xf]
  %v1342 = vld [vmem:[%s11 + $0x1f8] sm:$0xff]
  %v1343 = vld [vmem:[%s11 + $0x200] sm:$0xff]
  %v1344 = vld [vmem:[%s11 + $0x208] sm:$0xff]
  %v1345 = vld [vmem:[%s11 + $0x210] sm:$0xf]
  %v1346 = vld [vmem:[%s11 + $0x214] sm:$0xff]
  %v1347 = vld [vmem:[%s11 + $0x21c] sm:$0xff]
  %v1348 = vld [vmem:[%s11 + $0x224] sm:$0xff]
  %v1349 = vld [vmem:[%s11 + $0x22c] sm:$0xf]
  %v1350 = vld [vmem:[%s11 + $0x230] sm:$0xff]
  %v1351 = vld [vmem:[%s11 + $0x238] sm:$0xff]
  %v1352 = vld [vmem:[%s11 + $0x240] sm:$0xff]
  %v1353 = vld [vmem:[%s11 + $0x248] sm:$0xf]
  %v1354 = vld [vmem:[%s11 + $0x24c] sm:$0xff]
  %v1355 = vld [vmem:[%s11 + $0x254] sm:$0xff]
  %v1356 = vld [vmem:[%s11 + $0x25c] sm:$0xff]
  %v1357 = vld [vmem:[%s11 + $0x264] sm:$0xf]
  %v1358 = vld [vmem:[%s11 + $0x268] sm:$0xff]
  %v1359 = vld [vmem:[%s11 + $0x270] sm:$0xff]
  %v1360 = vld [vmem:[%s11 + $0x278] sm:$0xff]
  %v1361 = vld [vmem:[%s11 + $0x280] sm:$0xf]
  %v1362 = vld [vmem:[%s11 + $0x284] sm:$0xff]
  %v1363 = vld [vmem:[%s11 + $0x28c] sm:$0xff]
  %v1364 = vld [vmem:[%s11 + $0x294] sm:$0xff]
  %v1365 = vld [vmem:[%s11 + $0x29c] sm:$0xf]
  %v1366 = vld [vmem:[%s11 + $0x2a0] sm:$0xff]
  %v1367 = vld [vmem:[%s11 + $0x2a8] sm:$0xff]
  %v1368 = vld [vmem:[%s11 + $0x2b0] sm:$0xff]
  %v1369 = vld [vmem:[%s11 + $0x2b8] sm:$0xf]
  %v1370 = vld [vmem:[%s11 + $0x2bc] sm:$0xff]
  %v1371 = vld [vmem:[%s11 + $0x2c4] sm:$0xff]
  %v1372 = vld [vmem:[%s11 + $0x2cc] sm:$0xff]
  %v1373 = vld [vmem:[%s11 + $0x2d4] sm:$0xf]
  %v1374 = vld [vmem:[%s11 + $0x2d8] sm:$0xff]
  %v1375 = vld [vmem:[%s11 + $0x2e0] sm:$0xff]
  %v1376 = vld [vmem:[%s11 + $0x2e8] sm:$0xff]
  %v1377 = vld [vmem:[%s11 + $0x2f0] sm:$0xf]
  %v1378 = vld [vmem:[%s11 + $0x2f4] sm:$0xff]
  %v1379 = vld [vmem:[%s11 + $0x2fc] sm:$0xff]
  %v1380 = vld [vmem:[%s11 + $0x304] sm:$0xff]
  %v1381 = vld [vmem:[%s11 + $0x30c] sm:$0xf]
  %v1382 = vld [vmem:[%s11 + $0x310] sm:$0xff]
  %v1383 = vld [vmem:[%s11 + $0x318] sm:$0xff]
  %v1384 = vld [vmem:[%s11 + $0x320] sm:$0xff]
  %v1385 = vld [vmem:[%s11 + $0x328] sm:$0xf]
  %v1386 = vld [vmem:[%s11 + $0x32c] sm:$0xff]
  %v1387 = vld [vmem:[%s11 + $0x334] sm:$0xff]
  %v1388 = vld [vmem:[%s11 + $0x33c] sm:$0xff]
  %v1389 = vld [vmem:[%s11 + $0x344] sm:$0xf]
  %v1390 = vld [vmem:[%s11 + $0x348] sm:$0xff]
  %v1391 = vld [vmem:[%s11 + $0x350] sm:$0xff]
  %v1392 = vld [vmem:[%s11 + $0x358] sm:$0xff]
  %v1393 = vld [vmem:[%s11 + $0x360] sm:$0xf]
  %v1394 = vld [vmem:[%s11 + $0x364] sm:$0xff]
  %v1395 = vld [vmem:[%s11 + $0x36c] sm:$0xff]
  %v1396 = vld [vmem:[%s11 + $0x374] sm:$0xff]
  %v1397 = vld [vmem:[%s11 + $0x37c] sm:$0xf]
  %v1398 = vld [vmem:[%s12] sm:$0x7f]
  %v1400 = vlaneseq
  %v1401 = vshrl.u32 %v1400, 7
  %v1402 = vsub.s32 0, %v1401
  %v1403 = vrot.slane %v1398, %v1402
  %v1404 = vlaneseq
  %v1405 = vshrl.u32 %v1404, 7
  %v1406 = vsub.s32 1, %v1405
  %v1407 = vrot.slane %v1398, %v1406
  %v1408 = vlaneseq
  %v1409 = vshrl.u32 %v1408, 7
  %v1410 = vsub.s32 2, %v1409
  %v1411 = vrot.slane %v1398, %v1410
  %v1412 = vlaneseq
  %v1413 = vshrl.u32 %v1412, 7
  %v1414 = vsub.s32 3, %v1413
  %v1415 = vrot.slane %v1398, %v1414
  %v1416 = vlaneseq
  %v1417 = vshrl.u32 %v1416, 7
  %v1418 = vsub.s32 4, %v1417
  %v1419 = vrot.slane %v1398, %v1418
  %v1420 = vlaneseq
  %v1421 = vshrl.u32 %v1420, 7
  %v1422 = vsub.s32 5, %v1421
  %v1423 = vrot.slane %v1398, %v1422
  %v1424 = vlaneseq
  %v1425 = vshrl.u32 %v1424, 7
  %v1426 = vsub.s32 6, %v1425
  %v1427 = vrot.slane %v1398, %v1426
  %v1563 = vunpack.c.l.b16 %v1270
  %v1564 = vunpack.c.h.b16 %v1270
  %v1565 = vunpack.c.l.b16 %v1271
  %v1566 = vunpack.c.h.b16 %v1271
  %v1567 = vunpack.c.l.b16 %v1272
  %v1568 = vunpack.c.h.b16 %v1272
  %v1569 = vunpack.c.l.b16 %v1273
  %v1570 = vunpack.c.l.b16 %v1274
  %v1571 = vunpack.c.h.b16 %v1274
  %v1572 = vunpack.c.l.b16 %v1275
  %v1573 = vunpack.c.h.b16 %v1275
  %v1574 = vunpack.c.l.b16 %v1276
  %v1575 = vunpack.c.h.b16 %v1276
  %v1576 = vunpack.c.l.b16 %v1277
  %v1577 = vunpack.c.l.b16 %v1278
  %v1578 = vunpack.c.h.b16 %v1278
  %v1579 = vunpack.c.l.b16 %v1279
  %v1580 = vunpack.c.h.b16 %v1279
  %v1581 = vunpack.c.l.b16 %v1280
  %v1582 = vunpack.c.h.b16 %v1280
  %v1583 = vunpack.c.l.b16 %v1281
  %v1584 = vunpack.c.l.b16 %v1282
  %v1585 = vunpack.c.h.b16 %v1282
  %v1586 = vunpack.c.l.b16 %v1283
  %v1587 = vunpack.c.h.b16 %v1283
  %v1588 = vunpack.c.l.b16 %v1284
  %v1589 = vunpack.c.h.b16 %v1284
  %v1590 = vunpack.c.l.b16 %v1285
  %v1591 = vunpack.c.l.b16 %v1286
  %v1592 = vunpack.c.h.b16 %v1286
  %v1593 = vunpack.c.l.b16 %v1287
  %v1594 = vunpack.c.h.b16 %v1287
  %v1595 = vunpack.c.l.b16 %v1288
  %v1596 = vunpack.c.h.b16 %v1288
  %v1597 = vunpack.c.l.b16 %v1289
  %v1598 = vunpack.c.l.b16 %v1290
  %v1599 = vunpack.c.h.b16 %v1290
  %v1600 = vunpack.c.l.b16 %v1291
  %v1601 = vunpack.c.h.b16 %v1291
  %v1602 = vunpack.c.l.b16 %v1292
  %v1603 = vunpack.c.h.b16 %v1292
  %v1604 = vunpack.c.l.b16 %v1293
  %v1605 = vunpack.c.l.b16 %v1294
  %v1606 = vunpack.c.h.b16 %v1294
  %v1607 = vunpack.c.l.b16 %v1295
  %v1608 = vunpack.c.h.b16 %v1295
  %v1609 = vunpack.c.l.b16 %v1296
  %v1610 = vunpack.c.h.b16 %v1296
  %v1611 = vunpack.c.l.b16 %v1297
  %v1612 = vunpack.c.l.b16 %v1298
  %v1613 = vunpack.c.h.b16 %v1298
  %v1614 = vunpack.c.l.b16 %v1299
  %v1615 = vunpack.c.h.b16 %v1299
  %v1616 = vunpack.c.l.b16 %v1300
  %v1617 = vunpack.c.h.b16 %v1300
  %v1618 = vunpack.c.l.b16 %v1301
  %v1619 = vunpack.c.l.b16 %v1302
  %v1620 = vunpack.c.h.b16 %v1302
  %v1621 = vunpack.c.l.b16 %v1303
  %v1622 = vunpack.c.h.b16 %v1303
  %v1623 = vunpack.c.l.b16 %v1304
  %v1624 = vunpack.c.h.b16 %v1304
  %v1625 = vunpack.c.l.b16 %v1305
  %v1626 = vunpack.c.l.b16 %v1306
  %v1627 = vunpack.c.h.b16 %v1306
  %v1628 = vunpack.c.l.b16 %v1307
  %v1629 = vunpack.c.h.b16 %v1307
  %v1630 = vunpack.c.l.b16 %v1308
  %v1631 = vunpack.c.h.b16 %v1308
  %v1632 = vunpack.c.l.b16 %v1309
  %v1633 = vunpack.c.l.b16 %v1310
  %v1634 = vunpack.c.h.b16 %v1310
  %v1635 = vunpack.c.l.b16 %v1311
  %v1636 = vunpack.c.h.b16 %v1311
  %v1637 = vunpack.c.l.b16 %v1312
  %v1638 = vunpack.c.h.b16 %v1312
  %v1639 = vunpack.c.l.b16 %v1313
  %v1640 = vunpack.c.l.b16 %v1314
  %v1641 = vunpack.c.h.b16 %v1314
  %v1642 = vunpack.c.l.b16 %v1315
  %v1643 = vunpack.c.h.b16 %v1315
  %v1644 = vunpack.c.l.b16 %v1316
  %v1645 = vunpack.c.h.b16 %v1316
  %v1646 = vunpack.c.l.b16 %v1317
  %v1647 = vunpack.c.l.b16 %v1318
  %v1648 = vunpack.c.h.b16 %v1318
  %v1649 = vunpack.c.l.b16 %v1319
  %v1650 = vunpack.c.h.b16 %v1319
  %v1651 = vunpack.c.l.b16 %v1320
  %v1652 = vunpack.c.h.b16 %v1320
  %v1653 = vunpack.c.l.b16 %v1321
  %v1654 = vunpack.c.l.b16 %v1322
  %v1655 = vunpack.c.h.b16 %v1322
  %v1656 = vunpack.c.l.b16 %v1323
  %v1657 = vunpack.c.h.b16 %v1323
  %v1658 = vunpack.c.l.b16 %v1324
  %v1659 = vunpack.c.h.b16 %v1324
  %v1660 = vunpack.c.l.b16 %v1325
  %v1661 = vunpack.c.l.b16 %v1326
  %v1662 = vunpack.c.h.b16 %v1326
  %v1663 = vunpack.c.l.b16 %v1327
  %v1664 = vunpack.c.h.b16 %v1327
  %v1665 = vunpack.c.l.b16 %v1328
  %v1666 = vunpack.c.h.b16 %v1328
  %v1667 = vunpack.c.l.b16 %v1329
  %v1668 = vunpack.c.l.b16 %v1330
  %v1669 = vunpack.c.h.b16 %v1330
  %v1670 = vunpack.c.l.b16 %v1331
  %v1671 = vunpack.c.h.b16 %v1331
  %v1672 = vunpack.c.l.b16 %v1332
  %v1673 = vunpack.c.h.b16 %v1332
  %v1674 = vunpack.c.l.b16 %v1333
  %v1675 = vunpack.c.l.b16 %v1334
  %v1676 = vunpack.c.h.b16 %v1334
  %v1677 = vunpack.c.l.b16 %v1335
  %v1678 = vunpack.c.h.b16 %v1335
  %v1679 = vunpack.c.l.b16 %v1336
  %v1680 = vunpack.c.h.b16 %v1336
  %v1681 = vunpack.c.l.b16 %v1337
  %v1682 = vunpack.c.l.b16 %v1338
  %v1683 = vunpack.c.h.b16 %v1338
  %v1684 = vunpack.c.l.b16 %v1339
  %v1685 = vunpack.c.h.b16 %v1339
  %v1686 = vunpack.c.l.b16 %v1340
  %v1687 = vunpack.c.h.b16 %v1340
  %v1688 = vunpack.c.l.b16 %v1341
  %v1689 = vunpack.c.l.b16 %v1342
  %v1690 = vunpack.c.h.b16 %v1342
  %v1691 = vunpack.c.l.b16 %v1343
  %v1692 = vunpack.c.h.b16 %v1343
  %v1693 = vunpack.c.l.b16 %v1344
  %v1694 = vunpack.c.h.b16 %v1344
  %v1695 = vunpack.c.l.b16 %v1345
  %v1696 = vunpack.c.l.b16 %v1346
  %v1697 = vunpack.c.h.b16 %v1346
  %v1698 = vunpack.c.l.b16 %v1347
  %v1699 = vunpack.c.h.b16 %v1347
  %v1700 = vunpack.c.l.b16 %v1348
  %v1701 = vunpack.c.h.b16 %v1348
  %v1702 = vunpack.c.l.b16 %v1349
  %v1703 = vunpack.c.l.b16 %v1350
  %v1704 = vunpack.c.h.b16 %v1350
  %v1705 = vunpack.c.l.b16 %v1351
  %v1706 = vunpack.c.h.b16 %v1351
  %v1707 = vunpack.c.l.b16 %v1352
  %v1708 = vunpack.c.h.b16 %v1352
  %v1709 = vunpack.c.l.b16 %v1353
  %v1710 = vunpack.c.l.b16 %v1354
  %v1711 = vunpack.c.h.b16 %v1354
  %v1712 = vunpack.c.l.b16 %v1355
  %v1713 = vunpack.c.h.b16 %v1355
  %v1714 = vunpack.c.l.b16 %v1356
  %v1715 = vunpack.c.h.b16 %v1356
  %v1716 = vunpack.c.l.b16 %v1357
  %v1717 = vunpack.c.l.b16 %v1358
  %v1718 = vunpack.c.h.b16 %v1358
  %v1719 = vunpack.c.l.b16 %v1359
  %v1720 = vunpack.c.h.b16 %v1359
  %v1721 = vunpack.c.l.b16 %v1360
  %v1722 = vunpack.c.h.b16 %v1360
  %v1723 = vunpack.c.l.b16 %v1361
  %v1724 = vunpack.c.l.b16 %v1362
  %v1725 = vunpack.c.h.b16 %v1362
  %v1726 = vunpack.c.l.b16 %v1363
  %v1727 = vunpack.c.h.b16 %v1363
  %v1728 = vunpack.c.l.b16 %v1364
  %v1729 = vunpack.c.h.b16 %v1364
  %v1730 = vunpack.c.l.b16 %v1365
  %v1731 = vunpack.c.l.b16 %v1366
  %v1732 = vunpack.c.h.b16 %v1366
  %v1733 = vunpack.c.l.b16 %v1367
  %v1734 = vunpack.c.h.b16 %v1367
  %v1735 = vunpack.c.l.b16 %v1368
  %v1736 = vunpack.c.h.b16 %v1368
  %v1737 = vunpack.c.l.b16 %v1369
  %v1738 = vunpack.c.l.b16 %v1370
  %v1739 = vunpack.c.h.b16 %v1370
  %v1740 = vunpack.c.l.b16 %v1371
  %v1741 = vunpack.c.h.b16 %v1371
  %v1742 = vunpack.c.l.b16 %v1372
  %v1743 = vunpack.c.h.b16 %v1372
  %v1744 = vunpack.c.l.b16 %v1373
  %v1745 = vunpack.c.l.b16 %v1374
  %v1746 = vunpack.c.h.b16 %v1374
  %v1747 = vunpack.c.l.b16 %v1375
  %v1748 = vunpack.c.h.b16 %v1375
  %v1749 = vunpack.c.l.b16 %v1376
  %v1750 = vunpack.c.h.b16 %v1376
  %v1751 = vunpack.c.l.b16 %v1377
  %v1752 = vunpack.c.l.b16 %v1378
  %v1753 = vunpack.c.h.b16 %v1378
  %v1754 = vunpack.c.l.b16 %v1379
  %v1755 = vunpack.c.h.b16 %v1379
  %v1756 = vunpack.c.l.b16 %v1380
  %v1757 = vunpack.c.h.b16 %v1380
  %v1758 = vunpack.c.l.b16 %v1381
  %v1759 = vunpack.c.l.b16 %v1382
  %v1760 = vunpack.c.h.b16 %v1382
  %v1761 = vunpack.c.l.b16 %v1383
  %v1762 = vunpack.c.h.b16 %v1383
  %v1763 = vunpack.c.l.b16 %v1384
  %v1764 = vunpack.c.h.b16 %v1384
  %v1765 = vunpack.c.l.b16 %v1385
  %v1766 = vunpack.c.l.b16 %v1386
  %v1767 = vunpack.c.h.b16 %v1386
  %v1768 = vunpack.c.l.b16 %v1387
  %v1769 = vunpack.c.h.b16 %v1387
  %v1770 = vunpack.c.l.b16 %v1388
  %v1771 = vunpack.c.h.b16 %v1388
  %v1772 = vunpack.c.l.b16 %v1389
  %v1773 = vunpack.c.l.b16 %v1390
  %v1774 = vunpack.c.h.b16 %v1390
  %v1775 = vunpack.c.l.b16 %v1391
  %v1776 = vunpack.c.h.b16 %v1391
  %v1777 = vunpack.c.l.b16 %v1392
  %v1778 = vunpack.c.h.b16 %v1392
  %v1779 = vunpack.c.l.b16 %v1393
  %v1780 = vunpack.c.l.b16 %v1394
  %v1781 = vunpack.c.h.b16 %v1394
  %v1782 = vunpack.c.l.b16 %v1395
  %v1783 = vunpack.c.h.b16 %v1395
  %v1784 = vunpack.c.l.b16 %v1396
  %v1785 = vunpack.c.h.b16 %v1396
  %v1786 = vunpack.c.l.b16 %v1397
  %v1787 = vpack.c.b16 %v1570, %v1563
  %v1788 = vpack.c.b16 %v1571, %v1564
  %v1789 = vpack.c.b16 %v1572, %v1565
  %v1790 = vpack.c.b16 %v1573, %v1566
  %v1791 = vpack.c.b16 %v1574, %v1567
  %v1792 = vpack.c.b16 %v1575, %v1568
  %v1793 = vpack.c.b16 %v1576, %v1569
  %v1794 = vpack.c.b16 %v1584, %v1577
  %v1795 = vpack.c.b16 %v1585, %v1578
  %v1796 = vpack.c.b16 %v1586, %v1579
  %v1797 = vpack.c.b16 %v1587, %v1580
  %v1798 = vpack.c.b16 %v1588, %v1581
  %v1799 = vpack.c.b16 %v1589, %v1582
  %v1800 = vpack.c.b16 %v1590, %v1583
  %v1801 = vpack.c.b16 %v1598, %v1591
  %v1802 = vpack.c.b16 %v1599, %v1592
  %v1803 = vpack.c.b16 %v1600, %v1593
  %v1804 = vpack.c.b16 %v1601, %v1594
  %v1805 = vpack.c.b16 %v1602, %v1595
  %v1806 = vpack.c.b16 %v1603, %v1596
  %v1807 = vpack.c.b16 %v1604, %v1597
  %v1808 = vpack.c.b16 %v1612, %v1605
  %v1809 = vpack.c.b16 %v1613, %v1606
  %v1810 = vpack.c.b16 %v1614, %v1607
  %v1811 = vpack.c.b16 %v1615, %v1608
  %v1812 = vpack.c.b16 %v1616, %v1609
  %v1813 = vpack.c.b16 %v1617, %v1610
  %v1814 = vpack.c.b16 %v1618, %v1611
  %v1815 = vpack.c.b16 %v1626, %v1619
  %v1816 = vpack.c.b16 %v1627, %v1620
  %v1817 = vpack.c.b16 %v1628, %v1621
  %v1818 = vpack.c.b16 %v1629, %v1622
  %v1819 = vpack.c.b16 %v1630, %v1623
  %v1820 = vpack.c.b16 %v1631, %v1624
  %v1821 = vpack.c.b16 %v1632, %v1625
  %v1822 = vpack.c.b16 %v1640, %v1633
  %v1823 = vpack.c.b16 %v1641, %v1634
  %v1824 = vpack.c.b16 %v1642, %v1635
  %v1825 = vpack.c.b16 %v1643, %v1636
  %v1826 = vpack.c.b16 %v1644, %v1637
  %v1827 = vpack.c.b16 %v1645, %v1638
  %v1828 = vpack.c.b16 %v1646, %v1639
  %v1829 = vpack.c.b16 %v1654, %v1647
  %v1830 = vpack.c.b16 %v1655, %v1648
  %v1831 = vpack.c.b16 %v1656, %v1649
  %v1832 = vpack.c.b16 %v1657, %v1650
  %v1833 = vpack.c.b16 %v1658, %v1651
  %v1834 = vpack.c.b16 %v1659, %v1652
  %v1835 = vpack.c.b16 %v1660, %v1653
  %v1836 = vpack.c.b16 %v1668, %v1661
  %v1837 = vpack.c.b16 %v1669, %v1662
  %v1838 = vpack.c.b16 %v1670, %v1663
  %v1839 = vpack.c.b16 %v1671, %v1664
  %v1840 = vpack.c.b16 %v1672, %v1665
  %v1841 = vpack.c.b16 %v1673, %v1666
  %v1842 = vpack.c.b16 %v1674, %v1667
  %v1843 = vpack.c.b16 %v1682, %v1675
  %v1844 = vpack.c.b16 %v1683, %v1676
  %v1845 = vpack.c.b16 %v1684, %v1677
  %v1846 = vpack.c.b16 %v1685, %v1678
  %v1847 = vpack.c.b16 %v1686, %v1679
  %v1848 = vpack.c.b16 %v1687, %v1680
  %v1849 = vpack.c.b16 %v1688, %v1681
  %v1850 = vpack.c.b16 %v1696, %v1689
  %v1851 = vpack.c.b16 %v1697, %v1690
  %v1852 = vpack.c.b16 %v1698, %v1691
  %v1853 = vpack.c.b16 %v1699, %v1692
  %v1854 = vpack.c.b16 %v1700, %v1693
  %v1855 = vpack.c.b16 %v1701, %v1694
  %v1856 = vpack.c.b16 %v1702, %v1695
  %v1857 = vpack.c.b16 %v1710, %v1703
  %v1858 = vpack.c.b16 %v1711, %v1704
  %v1859 = vpack.c.b16 %v1712, %v1705
  %v1860 = vpack.c.b16 %v1713, %v1706
  %v1861 = vpack.c.b16 %v1714, %v1707
  %v1862 = vpack.c.b16 %v1715, %v1708
  %v1863 = vpack.c.b16 %v1716, %v1709
  %v1864 = vpack.c.b16 %v1724, %v1717
  %v1865 = vpack.c.b16 %v1725, %v1718
  %v1866 = vpack.c.b16 %v1726, %v1719
  %v1867 = vpack.c.b16 %v1727, %v1720
  %v1868 = vpack.c.b16 %v1728, %v1721
  %v1869 = vpack.c.b16 %v1729, %v1722
  %v1870 = vpack.c.b16 %v1730, %v1723
  %v1871 = vpack.c.b16 %v1738, %v1731
  %v1872 = vpack.c.b16 %v1739, %v1732
  %v1873 = vpack.c.b16 %v1740, %v1733
  %v1874 = vpack.c.b16 %v1741, %v1734
  %v1875 = vpack.c.b16 %v1742, %v1735
  %v1876 = vpack.c.b16 %v1743, %v1736
  %v1877 = vpack.c.b16 %v1744, %v1737
  %v1878 = vpack.c.b16 %v1752, %v1745
  %v1879 = vpack.c.b16 %v1753, %v1746
  %v1880 = vpack.c.b16 %v1754, %v1747
  %v1881 = vpack.c.b16 %v1755, %v1748
  %v1882 = vpack.c.b16 %v1756, %v1749
  %v1883 = vpack.c.b16 %v1757, %v1750
  %v1884 = vpack.c.b16 %v1758, %v1751
  %v1885 = vpack.c.b16 %v1766, %v1759
  %v1886 = vpack.c.b16 %v1767, %v1760
  %v1887 = vpack.c.b16 %v1768, %v1761
  %v1888 = vpack.c.b16 %v1769, %v1762
  %v1889 = vpack.c.b16 %v1770, %v1763
  %v1890 = vpack.c.b16 %v1771, %v1764
  %v1891 = vpack.c.b16 %v1772, %v1765
  %v1892 = vpack.c.b16 %v1780, %v1773
  %v1893 = vpack.c.b16 %v1781, %v1774
  %v1894 = vpack.c.b16 %v1782, %v1775
  %v1895 = vpack.c.b16 %v1783, %v1776
  %v1896 = vpack.c.b16 %v1784, %v1777
  %v1897 = vpack.c.b16 %v1785, %v1778
  %v1898 = vpack.c.b16 %v1786, %v1779
  %2011 = vmatprep.subr.bf16.mxu0 %v1788
  %2012 = vmatpush1.bf16.msra.mxu0 %v1787
  %2013 = vmatprep.subr.bf16.mxu0 %v1795
  %2014 = vmatpush1.bf16.msra.mxu0 %v1794
  %2015 = vmatprep.subr.bf16.mxu0 %v1802
  %2016 = vmatpush1.bf16.msra.mxu0 %v1801
  %2017 = vmatprep.subr.bf16.mxu0 %v1809
  %2018 = vmatpush1.bf16.msra.mxu0 %v1808
  %2019 = vmatprep.subr.bf16.mxu0 %v1816
  %2020 = vmatpush1.bf16.msra.mxu0 %v1815
  %2021 = vmatprep.subr.bf16.mxu0 %v1823
  %2022 = vmatpush1.bf16.msra.mxu0 %v1822
  %2023 = vmatprep.subr.bf16.mxu0 %v1830
  %2024 = vmatpush1.bf16.msra.mxu0 %v1829
  %2025 = vmatprep.subr.bf16.mxu0 %v1837
  %2026 = vmatpush1.bf16.msra.mxu0 %v1836
  %2027 = vmatprep.subr.bf16.mxu0 %v1844
  %2028 = vmatpush1.bf16.msra.mxu0 %v1843
  %2029 = vmatprep.subr.bf16.mxu0 %v1851
  %2030 = vmatpush1.bf16.msra.mxu0 %v1850
  %2031 = vmatprep.subr.bf16.mxu0 %v1858
  %2032 = vmatpush1.bf16.msra.mxu0 %v1857
  %2033 = vmatprep.subr.bf16.mxu0 %v1865
  %2034 = vmatpush1.bf16.msra.mxu0 %v1864
  %2035 = vmatprep.subr.bf16.mxu0 %v1872
  %2036 = vmatpush1.bf16.msra.mxu0 %v1871
  %2037 = vmatprep.subr.bf16.mxu0 %v1879
  %2038 = vmatpush1.bf16.msra.mxu0 %v1878
  %2039 = vmatprep.subr.bf16.mxu0 %v1886
  %2040 = vmatpush1.bf16.msra.mxu0 %v1885
  %2041 = vmatprep.subr.bf16.mxu0 %v1893
  %2042 = vmatpush1.bf16.msra.mxu0 %v1892
  %2043 = vmatprep.mubr.bf16.mxu0 %v1269
  %2044 = vmatmul.mubr.bf16.gmra.mrb[0].mxu0 %v1268
  %v2045 = vpop.f32.mrb[0].mxu0
  %v2046 = vadd.f32 %v1403, %v2045
  %v2047 = vpop.f32.mrb[0].mxu0
  %v2048 = vadd.f32 %v1407, %v2047
  %v2049 = vpop.f32.mrb[0].mxu0
  %v2050 = vpop.f32.mrb[0].mxu0
  %2051 = vdwg.mxu0
  %2052 = vmatprep.subr.bf16.mxu0 %v1790
  %2053 = vmatpush1.bf16.msra.mxu0 %v1789
  %2054 = vmatprep.subr.bf16.mxu0 %v1797
  %2055 = vmatpush1.bf16.msra.mxu0 %v1796
  %2056 = vmatprep.subr.bf16.mxu0 %v1804
  %2057 = vmatpush1.bf16.msra.mxu0 %v1803
  %2058 = vmatprep.subr.bf16.mxu0 %v1811
  %2059 = vmatpush1.bf16.msra.mxu0 %v1810
  %2060 = vmatprep.subr.bf16.mxu0 %v1818
  %2061 = vmatpush1.bf16.msra.mxu0 %v1817
  %2062 = vmatprep.subr.bf16.mxu0 %v1825
  %2063 = vmatpush1.bf16.msra.mxu0 %v1824
  %2064 = vmatprep.subr.bf16.mxu0 %v1832
  %2065 = vmatpush1.bf16.msra.mxu0 %v1831
  %2066 = vmatprep.subr.bf16.mxu0 %v1839
  %2067 = vmatpush1.bf16.msra.mxu0 %v1838
  %2068 = vmatprep.subr.bf16.mxu0 %v1846
  %2069 = vmatpush1.bf16.msra.mxu0 %v1845
  %2070 = vmatprep.subr.bf16.mxu0 %v1853
  %2071 = vmatpush1.bf16.msra.mxu0 %v1852
  %2072 = vmatprep.subr.bf16.mxu0 %v1860
  %2073 = vmatpush1.bf16.msra.mxu0 %v1859
  %2074 = vmatprep.subr.bf16.mxu0 %v1867
  %2075 = vmatpush1.bf16.msra.mxu0 %v1866
  %2076 = vmatprep.subr.bf16.mxu0 %v1874
  %2077 = vmatpush1.bf16.msra.mxu0 %v1873
  %2078 = vmatprep.subr.bf16.mxu0 %v1881
  %2079 = vmatpush1.bf16.msra.mxu0 %v1880
  %2080 = vmatprep.subr.bf16.mxu0 %v1888
  %2081 = vmatpush1.bf16.msra.mxu0 %v1887
  %2082 = vmatprep.subr.bf16.mxu0 %v1895
  %2083 = vmatpush1.bf16.msra.mxu0 %v1894
  %2084 = vmatprep.mubr.bf16.mxu0 %v1269
  %2085 = vmatmul.mubr.bf16.gmra.mrb[0].mxu0 %v1268
  %v2086 = vpop.f32.mrb[0].mxu0
  %v2087 = vadd.f32 %v1411, %v2086
  %v2088 = vpop.f32.mrb[0].mxu0
  %v2089 = vadd.f32 %v1415, %v2088
  %v2090 = vpop.f32.mrb[0].mxu0
  %v2091 = vpop.f32.mrb[0].mxu0
  %2092 = vdwg.mxu0
  %2093 = vmatprep.subr.bf16.mxu0 %v1792
  %2094 = vmatpush1.bf16.msra.mxu0 %v1791
  %2095 = vmatprep.subr.bf16.mxu0 %v1799
  %2096 = vmatpush1.bf16.msra.mxu0 %v1798
  %2097 = vmatprep.subr.bf16.mxu0 %v1806
  %2098 = vmatpush1.bf16.msra.mxu0 %v1805
  %2099 = vmatprep.subr.bf16.mxu0 %v1813
  %2100 = vmatpush1.bf16.msra.mxu0 %v1812
  %2101 = vmatprep.subr.bf16.mxu0 %v1820
  %2102 = vmatpush1.bf16.msra.mxu0 %v1819
  %2103 = vmatprep.subr.bf16.mxu0 %v1827
  %2104 = vmatpush1.bf16.msra.mxu0 %v1826
  %2105 = vmatprep.subr.bf16.mxu0 %v1834
  %2106 = vmatpush1.bf16.msra.mxu0 %v1833
  %2107 = vmatprep.subr.bf16.mxu0 %v1841
  %2108 = vmatpush1.bf16.msra.mxu0 %v1840
  %2109 = vmatprep.subr.bf16.mxu0 %v1848
  %2110 = vmatpush1.bf16.msra.mxu0 %v1847
  %2111 = vmatprep.subr.bf16.mxu0 %v1855
  %2112 = vmatpush1.bf16.msra.mxu0 %v1854
  %2113 = vmatprep.subr.bf16.mxu0 %v1862
  %2114 = vmatpush1.bf16.msra.mxu0 %v1861
  %2115 = vmatprep.subr.bf16.mxu0 %v1869
  %2116 = vmatpush1.bf16.msra.mxu0 %v1868
  %2117 = vmatprep.subr.bf16.mxu0 %v1876
  %2118 = vmatpush1.bf16.msra.mxu0 %v1875
  %2119 = vmatprep.subr.bf16.mxu0 %v1883
  %2120 = vmatpush1.bf16.msra.mxu0 %v1882
  %2121 = vmatprep.subr.bf16.mxu0 %v1890
  %2122 = vmatpush1.bf16.msra.mxu0 %v1889
  %2123 = vmatprep.subr.bf16.mxu0 %v1897
  %2124 = vmatpush1.bf16.msra.mxu0 %v1896
  %2125 = vmatprep.mubr.bf16.mxu0 %v1269
  %2126 = vmatmul.mubr.bf16.gmra.mrb[0].mxu0 %v1268
  %v2127 = vpop.f32.mrb[0].mxu0
  %v2128 = vadd.f32 %v1419, %v2127
  %v2129 = vpop.f32.mrb[0].mxu0
  %v2130 = vadd.f32 %v1423, %v2129
  %v2131 = vpop.f32.mrb[0].mxu0
  %v2132 = vpop.f32.mrb[0].mxu0
  %2133 = vdwg.mxu0
  %2134 = vmatprep.subr.bf16.mxu0 0
  %2135 = vmatpush1.bf16.msra.mxu0 %v1793
  %2136 = vmatprep.subr.bf16.mxu0 0
  %2137 = vmatpush1.bf16.msra.mxu0 %v1800
  %2138 = vmatprep.subr.bf16.mxu0 0
  %2139 = vmatpush1.bf16.msra.mxu0 %v1807
  %2140 = vmatprep.subr.bf16.mxu0 0
  %2141 = vmatpush1.bf16.msra.mxu0 %v1814
  %2142 = vmatprep.subr.bf16.mxu0 0
  %2143 = vmatpush1.bf16.msra.mxu0 %v1821
  %2144 = vmatprep.subr.bf16.mxu0 0
  %2145 = vmatpush1.bf16.msra.mxu0 %v1828
  %2146 = vmatprep.subr.bf16.mxu0 0
  %2147 = vmatpush1.bf16.msra.mxu0 %v1835
  %2148 = vmatprep.subr.bf16.mxu0 0
  %2149 = vmatpush1.bf16.msra.mxu0 %v1842
  %2150 = vmatprep.subr.bf16.mxu0 0
  %2151 = vmatpush1.bf16.msra.mxu0 %v1849
  %2152 = vmatprep.subr.bf16.mxu0 0
  %2153 = vmatpush1.bf16.msra.mxu0 %v1856
  %2154 = vmatprep.subr.bf16.mxu0 0
  %2155 = vmatpush1.bf16.msra.mxu0 %v1863
  %2156 = vmatprep.subr.bf16.mxu0 0
  %2157 = vmatpush1.bf16.msra.mxu0 %v1870
  %2158 = vmatprep.subr.bf16.mxu0 0
  %2159 = vmatpush1.bf16.msra.mxu0 %v1877
  %2160 = vmatprep.subr.bf16.mxu0 0
  %2161 = vmatpush1.bf16.msra.mxu0 %v1884
  %2162 = vmatprep.subr.bf16.mxu0 0
  %2163 = vmatpush1.bf16.msra.mxu0 %v1891
  %2164 = vmatprep.subr.bf16.mxu0 0
  %2165 = vmatpush1.bf16.msra.mxu0 %v1898
  %2166 = vmatprep.mubr.bf16.mxu0 %v1269
  %2167 = vmatmul.mubr.bf16.gmra.mrb[0].mxu0 %v1268
  %v2168 = vpop.f32.mrb[0].mxu0
  %v2169 = vadd.f32 %v1427, %v2168
  %v2170 = vpop.f32.mrb[0].mxu0
  %v2171 = vpop.f32.mrb[0].mxu0
  %v2172 = vpop.f32.mrb[0].mxu0
  %2173 = vdwg.mxu0
  %v2174 = vsub.f32 0.0, %v2046
  %v2175 = vsub.f32 0.0, %v2048
  %v2176 = vsub.f32 0.0, %v2087
  %v2177 = vsub.f32 0.0, %v2089
  %v2178 = vsub.f32 0.0, %v2128
  %v2179 = vsub.f32 0.0, %v2130
  %v2180 = vsub.f32 0.0, %v2169
  %v2181 = vmul.f32 %v2174, 1.442695
  %v2182 = vpow.pop %v2181
  %v2183 = vmul.f32 %v2175, 1.442695
  %v2184 = vpow.pop %v2183
  %v2185 = vmul.f32 %v2176, 1.442695
  %v2186 = vpow.pop %v2185
  %v2187 = vmul.f32 %v2177, 1.442695
  %v2188 = vpow.pop %v2187
  %v2189 = vmul.f32 %v2178, 1.442695
  %v2190 = vpow.pop %v2189
  %v2191 = vmul.f32 %v2179, 1.442695
  %v2192 = vpow.pop %v2191
  %v2193 = vmul.f32 %v2180, 1.442695
  %v2194 = vpow.pop %v2193
  %v2195 = vadd.f32 %v2182, 1.0
  %v2196 = vadd.f32 %v2184, 1.0
  %v2197 = vadd.f32 %v2186, 1.0
  %v2198 = vadd.f32 %v2188, 1.0
  %v2199 = vadd.f32 %v2190, 1.0
  %v2200 = vadd.f32 %v2192, 1.0
  %v2201 = vadd.f32 %v2194, 1.0
  %v2202 = vrcp.pop %v2195
  %v2203 = vrcp.pop %v2196
  %v2204 = vrcp.pop %v2197
  %v2205 = vrcp.pop %v2198
  %v2206 = vrcp.pop %v2199
  %v2207 = vrcp.pop %v2200
  %v2208 = vrcp.pop %v2201
  %v2209 = vpack.c.bf16 %v2202, %v2202
  %v2210 = vpack.c.bf16 %v2203, %v2203
  %v2211 = vpack.c.bf16 %v2204, %v2204
  %v2212 = vpack.c.bf16 %v2205, %v2205
  %v2213 = vpack.c.bf16 %v2206, %v2206
  %v2214 = vpack.c.bf16 %v2207, %v2207
  %v2215 = vpack.c.bf16 %v2208, %v2208
  %v2223 = vunpack.c.l.b16 %v2209
  %v2224 = vunpack.c.l.b16 %v2210
  %v2225 = vunpack.c.l.b16 %v2211
  %v2226 = vunpack.c.l.b16 %v2212
  %v2227 = vunpack.c.l.b16 %v2213
  %v2228 = vunpack.c.l.b16 %v2214
  %v2229 = vunpack.c.l.b16 %v2215
  %v2230 = vpack.c.b16 %v2224, %v2223
  %v2231 = vpack.c.b16 %v2226, %v2225
  %v2232 = vpack.c.b16 %v2228, %v2227
  %v2233 = vpack.c.b16 %v2229, %v2229
  %2238 = vst [vmem:[%s13] sm:$0xff] %v2230
  %2239 = vst [vmem:[%s13 + $0x8] sm:$0xff] %v2231
  %2240 = vst [vmem:[%s13 + $0x10] sm:$0xff] %v2232
  %vm2241 = vcmask 125952
  %2242 = vst.msk [vmem:[%s13 + $0x18] sm:$0xf] %vm2241, %v2233
  // Predicated region
  $region54: #{ae_forward.1} parent=0 // pred_check
    _
  $region55: #{ae_forward.1} parent=0 // pred_check_branch
    %2244 = sbr.rel (0) target = $region57
  $region56: #{ae_forward.1} parent=0 // pred_region
    _
  $region57: #{ae_forward.1} parent=0 // pred_fallthru
    _
  // Predicated region
  $region58: #{ae_forward.1} parent=0 // pred_check
    _
  $region59: #{ae_forward.1} parent=0 // pred_check_branch
    %2246 = sbr.rel (0) target = $region61
  $region60: #{ae_forward.1} parent=0 // pred_region
    _
  $region61: #{ae_forward.1} parent=0 // pred_fallthru
    _

</llo_original>
